<compile_context>
chip_gen: v5e
topology: v5e:2x2
jax: 0.10.0
libtpu: 0.0.40
codegen_flags: <defaults>
</compile_context>

<pallas_src>
import functools

import jax
import jax.numpy as jnp
from jax.experimental import pallas as pl
from jax.experimental.pallas import tpu as pltpu

_LANES = 128
_SUBLANES = 8


def _round_up(x, m):
    return (x + m - 1) // m * m


def _sepconv_kernel(in_ref, v_ref, h_ref, out_ref, *, filter_size, tile_h, w_out_p):
    # in_ref : (1, C, H_in_p, W_in_p)  full (padded) sample, resident across H tiles
    # v_ref  : (1, F, TH, W_p)         vertical taps for this H band
    # h_ref  : (1, F, TH, W_p)         horizontal taps for this H band
    # out_ref: (1, C, TH, W_p)
    F = filter_size
    TH = tile_h
    Wp = w_out_p

    t = pl.program_id(1)
    row0 = pl.multiple_of(t * TH, _SUBLANES)

    v = v_ref[0].astype(jnp.float32)   # (F, TH, Wp)
    h = h_ref[0].astype(jnp.float32)   # (F, TH, Wp)

    C = in_ref.shape[1]
    acc = jnp.zeros((C, TH, Wp), dtype=jnp.float32)

    # TODO(synk): for production filter sizes (F ~ 51) switch the unrolled
    # Python tap loops to lax.fori_loop + a VMEM scratch accumulator to bound
    # live ranges and compile time.
    for j in range(F):
        # One lane-offset ref load per horizontal tap (F total, not F*F): the
        # input W is over-padded by a full 128-lane halo so this slice is
        # always in bounds and exactly Wp (multiple of 128) lanes wide.
        xj = in_ref[0, :, pl.ds(row0, TH + F - 1), pl.ds(j, Wp)].astype(jnp.float32)
        # row[c, y, x] = sum_i input[c, y+i, x+j] * vertical[i, y, x]
        row = xj[:, 0:TH, :] * v[0][None, :, :]
        for i in range(1, F):
            row = row + xj[:, i:i + TH, :] * v[i][None, :, :]
        acc = acc + row * h[j][None, :, :]

    out_ref[0] = acc.astype(out_ref.dtype)


def sepconv(ten_input, ten_vertical, ten_horizontal, *, tile_h=8):
    N, C, H_in, W_in = ten_input.shape
    Nv, Fv, Hv, Wv = ten_vertical.shape
    Nh, Fh, Hh, Wh = ten_horizontal.shape

    assert Nv == N and Nh == N, "batch mismatch"
    assert Fv == Fh, "vertical/horizontal filter sizes must match"
    F = Fv
    H_out = H_in - F + 1
    W_out = W_in - F + 1
    assert Hv == H_out and Hh == H_out, "output height mismatch"
    assert Wv == W_out and Wh == W_out, "output width mismatch"
    assert F - 1 <= _LANES, "filter larger than the 128-lane input halo"

    tile_h = _round_up(tile_h, _SUBLANES)
    H_out_p = _round_up(H_out, tile_h)
    W_p = _round_up(W_out, _LANES)          # lane-dense output width
    H_in_p = H_out_p + F - 1
    W_in_p = W_p + _LANES                   # +128-lane halo for lane-offset slices

    dt = ten_input.dtype
    x_p = jnp.zeros((N, C, H_in_p, W_in_p), dt).at[:, :, :H_in, :W_in].set(ten_input)
    v_p = jnp.zeros((N, F, H_out_p, W_p), ten_vertical.dtype).at[:, :, :H_out, :W_out].set(ten_vertical)
    h_p = jnp.zeros((N, F, H_out_p, W_p), ten_horizontal.dtype).at[:, :, :H_out, :W_out].set(ten_horizontal)

    n_t = H_out_p // tile_h
    kernel = functools.partial(
        _sepconv_kernel, filter_size=F, tile_h=tile_h, w_out_p=W_p
    )

    # TODO(synk): for production frame sizes, block the input over H as well
    # (halo'd blocks via pl.Element offsets or manual make_async_copy) instead
    # of keeping the full per-sample slab as one block, and size tiles for
    # v7x's 64 MiB VMEM (vmem_limit_bytes).
    out_p = pl.pallas_call(
        kernel,
        out_shape=jax.ShapeDtypeStruct((N, C, H_out_p, W_p), dt),
        grid_spec=pltpu.PrefetchScalarGridSpec(
            num_scalar_prefetch=0,
            grid=(N, n_t),
            in_specs=[
                pl.BlockSpec((1, C, H_in_p, W_in_p), lambda b, t: (b, 0, 0, 0)),
                pl.BlockSpec((1, F, tile_h, W_p), lambda b, t: (b, 0, t, 0)),
                pl.BlockSpec((1, F, tile_h, W_p), lambda b, t: (b, 0, t, 0)),
            ],
            out_specs=pl.BlockSpec((1, C, tile_h, W_p), lambda b, t: (b, 0, t, 0)),
        ),
        compiler_params=pltpu.CompilerParams(
            dimension_semantics=("parallel", "parallel"),
        ),
    )(x_p, v_p, h_p)

    return out_p[:, :, :H_out, :W_out]


def sepconv_reference(ten_input, ten_vertical, ten_horizontal):
    """Pure-JAX reference with identical semantics."""
    N, C, H_in, W_in = ten_input.shape
    F = ten_vertical.shape[1]
    H_out = H_in - F + 1
    W_out = W_in - F + 1
    x = ten_input.astype(jnp.float32)
    v = ten_vertical.astype(jnp.float32)
    h = ten_horizontal.astype(jnp.float32)
    out = jnp.zeros((N, C, H_out, W_out), dtype=jnp.float32)
    for i in range(F):
        for j in range(F):
            patch = x[:, :, i:i + H_out, j:j + W_out]
            out = out + patch * (v[:, i] * h[:, j])[:, None, :, :]
    return out.astype(ten_input.dtype)


if __name__ == "__main__":
    key = jax.random.PRNGKey(0)
    k1, k2, k3 = jax.random.split(key, 3)

    N, C, H_in, W_in = 2, 4, 16, 16
    F = 5
    H_out, W_out = H_in - F + 1, W_in - F + 1  # 12, 12

    ten_input = jax.random.normal(k1, (N, C, H_in, W_in), dtype=jnp.float32)
    ten_vertical = jax.random.normal(k2, (N, F, H_out, W_out), dtype=jnp.float32)
    ten_horizontal = jax.random.normal(k3, (N, F, H_out, W_out), dtype=jnp.float32)

    out = sepconv(ten_input, ten_vertical, ten_horizontal)
    out = jax.block_until_ready(out)

    ref = sepconv_reference(ten_input, ten_vertical, ten_horizontal)
    assert out.shape == (N, C, H_out, W_out)
    assert jnp.allclose(out, ref, atol=1e-4, rtol=1e-4), "mismatch vs reference"

    print("KERNEL_OK")
</pallas_src>

<mosaic_0001>
module attributes {stable_mosaic.version = 11 : i64} {
  func.func @_sepconv_kernel(%arg0: i32, %arg1: i32, %arg2: memref<1x4x20x256xf32, #tpu.memory_space<vmem>>, %arg3: memref<1x5x8x128xf32, #tpu.memory_space<vmem>>, %arg4: memref<1x5x8x128xf32, #tpu.memory_space<vmem>>, %arg5: memref<1x4x8x128xf32, #tpu.memory_space<vmem>>) attributes {dimension_semantics = [#tpu.dimension_semantics<parallel>, #tpu.dimension_semantics<parallel>], iteration_bounds = array<i64: 2, 2>, scalar_prefetch = 0 : i64, scratch_operands = 0 : i64, tpu.core_type = #tpu.core_type<tc>, window_params = [{transform_indices = @transform_0, window_bounds = array<i64: 1, 4, 20, 256>}, {transform_indices = @transform_1, window_bounds = array<i64: 1, 5, 8, 128>}, {transform_indices = @transform_2, window_bounds = array<i64: 1, 5, 8, 128>}, {transform_indices = @transform_3, window_bounds = array<i64: 1, 4, 8, 128>}]} {
    %c8_i32 = arith.constant 8 : i32
    %0 = arith.muli %arg1, %c8_i32 : i32
    %1 = tpu.assume_multiple %0, 8 : i32
    %c0 = arith.constant 0 : index
    %c0_0 = arith.constant 0 : index
    %c0_1 = arith.constant 0 : index
    %c0_2 = arith.constant 0 : index
    %2 = vector.load %arg3[%c0, %c0_0, %c0_1, %c0_2] : memref<1x5x8x128xf32, #tpu.memory_space<vmem>>, vector<1x5x8x128xf32>
    %3 = vector.shape_cast %2 : vector<1x5x8x128xf32> to vector<5x8x128xf32>
    %c0_3 = arith.constant 0 : index
    %c0_4 = arith.constant 0 : index
    %c0_5 = arith.constant 0 : index
    %c0_6 = arith.constant 0 : index
    %4 = vector.load %arg4[%c0_3, %c0_4, %c0_5, %c0_6] : memref<1x5x8x128xf32, #tpu.memory_space<vmem>>, vector<1x5x8x128xf32>
    %5 = vector.shape_cast %4 : vector<1x5x8x128xf32> to vector<5x8x128xf32>
    %cst = arith.constant 0.000000e+00 : f32
    %6 = vector.broadcast %cst : f32 to vector<4x8x128xf32>
    %c0_7 = arith.constant 0 : index
    %c0_8 = arith.constant 0 : index
    %7 = arith.index_cast %1 : i32 to index
    %c0_9 = arith.constant 0 : index
    %8 = vector.load %arg2[%c0_7, %c0_8, %7, %c0_9] : memref<1x4x20x256xf32, #tpu.memory_space<vmem>>, vector<1x4x12x128xf32>
    %9 = vector.shape_cast %8 : vector<1x4x12x128xf32> to vector<4x12x128xf32>
    %10 = vector.extract_strided_slice %9 {offsets = [0, 0, 0], sizes = [4, 8, 128], strides = [1, 1, 1]} : vector<4x12x128xf32> to vector<4x8x128xf32>
    %11 = vector.extract_strided_slice %3 {offsets = [0, 0, 0], sizes = [1, 8, 128], strides = [1, 1, 1]} : vector<5x8x128xf32> to vector<1x8x128xf32>
    %12 = vector.shape_cast %11 : vector<1x8x128xf32> to vector<8x128xf32>
    %13 = vector.shape_cast %12 : vector<8x128xf32> to vector<1x8x128xf32>
    %14 = vector.broadcast %13 : vector<1x8x128xf32> to vector<4x8x128xf32>
    %15 = arith.mulf %10, %14 : vector<4x8x128xf32>
    %16 = vector.extract_strided_slice %9 {offsets = [0, 1, 0], sizes = [4, 8, 128], strides = [1, 1, 1]} : vector<4x12x128xf32> to vector<4x8x128xf32>
    %17 = vector.extract_strided_slice %3 {offsets = [1, 0, 0], sizes = [1, 8, 128], strides = [1, 1, 1]} : vector<5x8x128xf32> to vector<1x8x128xf32>
    %18 = vector.shape_cast %17 : vector<1x8x128xf32> to vector<8x128xf32>
    %19 = vector.shape_cast %18 : vector<8x128xf32> to vector<1x8x128xf32>
    %20 = vector.broadcast %19 : vector<1x8x128xf32> to vector<4x8x128xf32>
    %21 = arith.mulf %16, %20 : vector<4x8x128xf32>
    %22 = arith.addf %15, %21 : vector<4x8x128xf32>
    %23 = vector.extract_strided_slice %9 {offsets = [0, 2, 0], sizes = [4, 8, 128], strides = [1, 1, 1]} : vector<4x12x128xf32> to vector<4x8x128xf32>
    %24 = vector.extract_strided_slice %3 {offsets = [2, 0, 0], sizes = [1, 8, 128], strides = [1, 1, 1]} : vector<5x8x128xf32> to vector<1x8x128xf32>
    %25 = vector.shape_cast %24 : vector<1x8x128xf32> to vector<8x128xf32>
    %26 = vector.shape_cast %25 : vector<8x128xf32> to vector<1x8x128xf32>
    %27 = vector.broadcast %26 : vector<1x8x128xf32> to vector<4x8x128xf32>
    %28 = arith.mulf %23, %27 : vector<4x8x128xf32>
    %29 = arith.addf %22, %28 : vector<4x8x128xf32>
    %30 = vector.extract_strided_slice %9 {offsets = [0, 3, 0], sizes = [4, 8, 128], strides = [1, 1, 1]} : vector<4x12x128xf32> to vector<4x8x128xf32>
    %31 = vector.extract_strided_slice %3 {offsets = [3, 0, 0], sizes = [1, 8, 128], strides = [1, 1, 1]} : vector<5x8x128xf32> to vector<1x8x128xf32>
    %32 = vector.shape_cast %31 : vector<1x8x128xf32> to vector<8x128xf32>
    %33 = vector.shape_cast %32 : vector<8x128xf32> to vector<1x8x128xf32>
    %34 = vector.broadcast %33 : vector<1x8x128xf32> to vector<4x8x128xf32>
    %35 = arith.mulf %30, %34 : vector<4x8x128xf32>
    %36 = arith.addf %29, %35 : vector<4x8x128xf32>
    %37 = vector.extract_strided_slice %9 {offsets = [0, 4, 0], sizes = [4, 8, 128], strides = [1, 1, 1]} : vector<4x12x128xf32> to vector<4x8x128xf32>
    %38 = vector.extract_strided_slice %3 {offsets = [4, 0, 0], sizes = [1, 8, 128], strides = [1, 1, 1]} : vector<5x8x128xf32> to vector<1x8x128xf32>
    %39 = vector.shape_cast %38 : vector<1x8x128xf32> to vector<8x128xf32>
    %40 = vector.shape_cast %39 : vector<8x128xf32> to vector<1x8x128xf32>
    %41 = vector.broadcast %40 : vector<1x8x128xf32> to vector<4x8x128xf32>
    %42 = arith.mulf %37, %41 : vector<4x8x128xf32>
    %43 = arith.addf %36, %42 : vector<4x8x128xf32>
    %44 = vector.extract_strided_slice %5 {offsets = [0, 0, 0], sizes = [1, 8, 128], strides = [1, 1, 1]} : vector<5x8x128xf32> to vector<1x8x128xf32>
    %45 = vector.shape_cast %44 : vector<1x8x128xf32> to vector<8x128xf32>
    %46 = vector.shape_cast %45 : vector<8x128xf32> to vector<1x8x128xf32>
    %47 = vector.broadcast %46 : vector<1x8x128xf32> to vector<4x8x128xf32>
    %48 = arith.mulf %43, %47 : vector<4x8x128xf32>
    %49 = arith.addf %6, %48 : vector<4x8x128xf32>
    %c0_10 = arith.constant 0 : index
    %c0_11 = arith.constant 0 : index
    %50 = arith.index_cast %1 : i32 to index
    %c1 = arith.constant 1 : index
    %51 = vector.load %arg2[%c0_10, %c0_11, %50, %c1] : memref<1x4x20x256xf32, #tpu.memory_space<vmem>>, vector<1x4x12x128xf32>
    %52 = vector.shape_cast %51 : vector<1x4x12x128xf32> to vector<4x12x128xf32>
    %53 = vector.extract_strided_slice %52 {offsets = [0, 0, 0], sizes = [4, 8, 128], strides = [1, 1, 1]} : vector<4x12x128xf32> to vector<4x8x128xf32>
    %54 = vector.extract_strided_slice %3 {offsets = [0, 0, 0], sizes = [1, 8, 128], strides = [1, 1, 1]} : vector<5x8x128xf32> to vector<1x8x128xf32>
    %55 = vector.shape_cast %54 : vector<1x8x128xf32> to vector<8x128xf32>
    %56 = vector.shape_cast %55 : vector<8x128xf32> to vector<1x8x128xf32>
    %57 = vector.broadcast %56 : vector<1x8x128xf32> to vector<4x8x128xf32>
    %58 = arith.mulf %53, %57 : vector<4x8x128xf32>
    %59 = vector.extract_strided_slice %52 {offsets = [0, 1, 0], sizes = [4, 8, 128], strides = [1, 1, 1]} : vector<4x12x128xf32> to vector<4x8x128xf32>
    %60 = vector.extract_strided_slice %3 {offsets = [1, 0, 0], sizes = [1, 8, 128], strides = [1, 1, 1]} : vector<5x8x128xf32> to vector<1x8x128xf32>
    %61 = vector.shape_cast %60 : vector<1x8x128xf32> to vector<8x128xf32>
    %62 = vector.shape_cast %61 : vector<8x128xf32> to vector<1x8x128xf32>
    %63 = vector.broadcast %62 : vector<1x8x128xf32> to vector<4x8x128xf32>
    %64 = arith.mulf %59, %63 : vector<4x8x128xf32>
    %65 = arith.addf %58, %64 : vector<4x8x128xf32>
    %66 = vector.extract_strided_slice %52 {offsets = [0, 2, 0], sizes = [4, 8, 128], strides = [1, 1, 1]} : vector<4x12x128xf32> to vector<4x8x128xf32>
    %67 = vector.extract_strided_slice %3 {offsets = [2, 0, 0], sizes = [1, 8, 128], strides = [1, 1, 1]} : vector<5x8x128xf32> to vector<1x8x128xf32>
    %68 = vector.shape_cast %67 : vector<1x8x128xf32> to vector<8x128xf32>
    %69 = vector.shape_cast %68 : vector<8x128xf32> to vector<1x8x128xf32>
    %70 = vector.broadcast %69 : vector<1x8x128xf32> to vector<4x8x128xf32>
    %71 = arith.mulf %66, %70 : vector<4x8x128xf32>
    %72 = arith.addf %65, %71 : vector<4x8x128xf32>
    %73 = vector.extract_strided_slice %52 {offsets = [0, 3, 0], sizes = [4, 8, 128], strides = [1, 1, 1]} : vector<4x12x128xf32> to vector<4x8x128xf32>
    %74 = vector.extract_strided_slice %3 {offsets = [3, 0, 0], sizes = [1, 8, 128], strides = [1, 1, 1]} : vector<5x8x128xf32> to vector<1x8x128xf32>
    %75 = vector.shape_cast %74 : vector<1x8x128xf32> to vector<8x128xf32>
    %76 = vector.shape_cast %75 : vector<8x128xf32> to vector<1x8x128xf32>
    %77 = vector.broadcast %76 : vector<1x8x128xf32> to vector<4x8x128xf32>
    %78 = arith.mulf %73, %77 : vector<4x8x128xf32>
    %79 = arith.addf %72, %78 : vector<4x8x128xf32>
    %80 = vector.extract_strided_slice %52 {offsets = [0, 4, 0], sizes = [4, 8, 128], strides = [1, 1, 1]} : vector<4x12x128xf32> to vector<4x8x128xf32>
    %81 = vector.extract_strided_slice %3 {offsets = [4, 0, 0], sizes = [1, 8, 128], strides = [1, 1, 1]} : vector<5x8x128xf32> to vector<1x8x128xf32>
    %82 = vector.shape_cast %81 : vector<1x8x128xf32> to vector<8x128xf32>
    %83 = vector.shape_cast %82 : vector<8x128xf32> to vector<1x8x128xf32>
    %84 = vector.broadcast %83 : vector<1x8x128xf32> to vector<4x8x128xf32>
    %85 = arith.mulf %80, %84 : vector<4x8x128xf32>
    %86 = arith.addf %79, %85 : vector<4x8x128xf32>
    %87 = vector.extract_strided_slice %5 {offsets = [1, 0, 0], sizes = [1, 8, 128], strides = [1, 1, 1]} : vector<5x8x128xf32> to vector<1x8x128xf32>
    %88 = vector.shape_cast %87 : vector<1x8x128xf32> to vector<8x128xf32>
    %89 = vector.shape_cast %88 : vector<8x128xf32> to vector<1x8x128xf32>
    %90 = vector.broadcast %89 : vector<1x8x128xf32> to vector<4x8x128xf32>
    %91 = arith.mulf %86, %90 : vector<4x8x128xf32>
    %92 = arith.addf %49, %91 : vector<4x8x128xf32>
    %c0_12 = arith.constant 0 : index
    %c0_13 = arith.constant 0 : index
    %93 = arith.index_cast %1 : i32 to index
    %c2 = arith.constant 2 : index
    %94 = vector.load %arg2[%c0_12, %c0_13, %93, %c2] : memref<1x4x20x256xf32, #tpu.memory_space<vmem>>, vector<1x4x12x128xf32>
    %95 = vector.shape_cast %94 : vector<1x4x12x128xf32> to vector<4x12x128xf32>
    %96 = vector.extract_strided_slice %95 {offsets = [0, 0, 0], sizes = [4, 8, 128], strides = [1, 1, 1]} : vector<4x12x128xf32> to vector<4x8x128xf32>
    %97 = vector.extract_strided_slice %3 {offsets = [0, 0, 0], sizes = [1, 8, 128], strides = [1, 1, 1]} : vector<5x8x128xf32> to vector<1x8x128xf32>
    %98 = vector.shape_cast %97 : vector<1x8x128xf32> to vector<8x128xf32>
    %99 = vector.shape_cast %98 : vector<8x128xf32> to vector<1x8x128xf32>
    %100 = vector.broadcast %99 : vector<1x8x128xf32> to vector<4x8x128xf32>
    %101 = arith.mulf %96, %100 : vector<4x8x128xf32>
    %102 = vector.extract_strided_slice %95 {offsets = [0, 1, 0], sizes = [4, 8, 128], strides = [1, 1, 1]} : vector<4x12x128xf32> to vector<4x8x128xf32>
    %103 = vector.extract_strided_slice %3 {offsets = [1, 0, 0], sizes = [1, 8, 128], strides = [1, 1, 1]} : vector<5x8x128xf32> to vector<1x8x128xf32>
    %104 = vector.shape_cast %103 : vector<1x8x128xf32> to vector<8x128xf32>
    %105 = vector.shape_cast %104 : vector<8x128xf32> to vector<1x8x128xf32>
    %106 = vector.broadcast %105 : vector<1x8x128xf32> to vector<4x8x128xf32>
    %107 = arith.mulf %102, %106 : vector<4x8x128xf32>
    %108 = arith.addf %101, %107 : vector<4x8x128xf32>
    %109 = vector.extract_strided_slice %95 {offsets = [0, 2, 0], sizes = [4, 8, 128], strides = [1, 1, 1]} : vector<4x12x128xf32> to vector<4x8x128xf32>
    %110 = vector.extract_strided_slice %3 {offsets = [2, 0, 0], sizes = [1, 8, 128], strides = [1, 1, 1]} : vector<5x8x128xf32> to vector<1x8x128xf32>
    %111 = vector.shape_cast %110 : vector<1x8x128xf32> to vector<8x128xf32>
    %112 = vector.shape_cast %111 : vector<8x128xf32> to vector<1x8x128xf32>
    %113 = vector.broadcast %112 : vector<1x8x128xf32> to vector<4x8x128xf32>
    %114 = arith.mulf %109, %113 : vector<4x8x128xf32>
    %115 = arith.addf %108, %114 : vector<4x8x128xf32>
    %116 = vector.extract_strided_slice %95 {offsets = [0, 3, 0], sizes = [4, 8, 128], strides = [1, 1, 1]} : vector<4x12x128xf32> to vector<4x8x128xf32>
    %117 = vector.extract_strided_slice %3 {offsets = [3, 0, 0], sizes = [1, 8, 128], strides = [1, 1, 1]} : vector<5x8x128xf32> to vector<1x8x128xf32>
    %118 = vector.shape_cast %117 : vector<1x8x128xf32> to vector<8x128xf32>
    %119 = vector.shape_cast %118 : vector<8x128xf32> to vector<1x8x128xf32>
    %120 = vector.broadcast %119 : vector<1x8x128xf32> to vector<4x8x128xf32>
    %121 = arith.mulf %116, %120 : vector<4x8x128xf32>
    %122 = arith.addf %115, %121 : vector<4x8x128xf32>
    %123 = vector.extract_strided_slice %95 {offsets = [0, 4, 0], sizes = [4, 8, 128], strides = [1, 1, 1]} : vector<4x12x128xf32> to vector<4x8x128xf32>
    %124 = vector.extract_strided_slice %3 {offsets = [4, 0, 0], sizes = [1, 8, 128], strides = [1, 1, 1]} : vector<5x8x128xf32> to vector<1x8x128xf32>
    %125 = vector.shape_cast %124 : vector<1x8x128xf32> to vector<8x128xf32>
    %126 = vector.shape_cast %125 : vector<8x128xf32> to vector<1x8x128xf32>
    %127 = vector.broadcast %126 : vector<1x8x128xf32> to vector<4x8x128xf32>
    %128 = arith.mulf %123, %127 : vector<4x8x128xf32>
    %129 = arith.addf %122, %128 : vector<4x8x128xf32>
    %130 = vector.extract_strided_slice %5 {offsets = [2, 0, 0], sizes = [1, 8, 128], strides = [1, 1, 1]} : vector<5x8x128xf32> to vector<1x8x128xf32>
    %131 = vector.shape_cast %130 : vector<1x8x128xf32> to vector<8x128xf32>
    %132 = vector.shape_cast %131 : vector<8x128xf32> to vector<1x8x128xf32>
    %133 = vector.broadcast %132 : vector<1x8x128xf32> to vector<4x8x128xf32>
    %134 = arith.mulf %129, %133 : vector<4x8x128xf32>
    %135 = arith.addf %92, %134 : vector<4x8x128xf32>
    %c0_14 = arith.constant 0 : index
    %c0_15 = arith.constant 0 : index
    %136 = arith.index_cast %1 : i32 to index
    %c3 = arith.constant 3 : index
    %137 = vector.load %arg2[%c0_14, %c0_15, %136, %c3] : memref<1x4x20x256xf32, #tpu.memory_space<vmem>>, vector<1x4x12x128xf32>
    %138 = vector.shape_cast %137 : vector<1x4x12x128xf32> to vector<4x12x128xf32>
    %139 = vector.extract_strided_slice %138 {offsets = [0, 0, 0], sizes = [4, 8, 128], strides = [1, 1, 1]} : vector<4x12x128xf32> to vector<4x8x128xf32>
    %140 = vector.extract_strided_slice %3 {offsets = [0, 0, 0], sizes = [1, 8, 128], strides = [1, 1, 1]} : vector<5x8x128xf32> to vector<1x8x128xf32>
    %141 = vector.shape_cast %140 : vector<1x8x128xf32> to vector<8x128xf32>
    %142 = vector.shape_cast %141 : vector<8x128xf32> to vector<1x8x128xf32>
    %143 = vector.broadcast %142 : vector<1x8x128xf32> to vector<4x8x128xf32>
    %144 = arith.mulf %139, %143 : vector<4x8x128xf32>
    %145 = vector.extract_strided_slice %138 {offsets = [0, 1, 0], sizes = [4, 8, 128], strides = [1, 1, 1]} : vector<4x12x128xf32> to vector<4x8x128xf32>
    %146 = vector.extract_strided_slice %3 {offsets = [1, 0, 0], sizes = [1, 8, 128], strides = [1, 1, 1]} : vector<5x8x128xf32> to vector<1x8x128xf32>
    %147 = vector.shape_cast %146 : vector<1x8x128xf32> to vector<8x128xf32>
    %148 = vector.shape_cast %147 : vector<8x128xf32> to vector<1x8x128xf32>
    %149 = vector.broadcast %148 : vector<1x8x128xf32> to vector<4x8x128xf32>
    %150 = arith.mulf %145, %149 : vector<4x8x128xf32>
    %151 = arith.addf %144, %150 : vector<4x8x128xf32>
    %152 = vector.extract_strided_slice %138 {offsets = [0, 2, 0], sizes = [4, 8, 128], strides = [1, 1, 1]} : vector<4x12x128xf32> to vector<4x8x128xf32>
    %153 = vector.extract_strided_slice %3 {offsets = [2, 0, 0], sizes = [1, 8, 128], strides = [1, 1, 1]} : vector<5x8x128xf32> to vector<1x8x128xf32>
    %154 = vector.shape_cast %153 : vector<1x8x128xf32> to vector<8x128xf32>
    %155 = vector.shape_cast %154 : vector<8x128xf32> to vector<1x8x128xf32>
    %156 = vector.broadcast %155 : vector<1x8x128xf32> to vector<4x8x128xf32>
    %157 = arith.mulf %152, %156 : vector<4x8x128xf32>
    %158 = arith.addf %151, %157 : vector<4x8x128xf32>
    %159 = vector.extract_strided_slice %138 {offsets = [0, 3, 0], sizes = [4, 8, 128], strides = [1, 1, 1]} : vector<4x12x128xf32> to vector<4x8x128xf32>
    %160 = vector.extract_strided_slice %3 {offsets = [3, 0, 0], sizes = [1, 8, 128], strides = [1, 1, 1]} : vector<5x8x128xf32> to vector<1x8x128xf32>
    %161 = vector.shape_cast %160 : vector<1x8x128xf32> to vector<8x128xf32>
    %162 = vector.shape_cast %161 : vector<8x128xf32> to vector<1x8x128xf32>
    %163 = vector.broadcast %162 : vector<1x8x128xf32> to vector<4x8x128xf32>
    %164 = arith.mulf %159, %163 : vector<4x8x128xf32>
    %165 = arith.addf %158, %164 : vector<4x8x128xf32>
    %166 = vector.extract_strided_slice %138 {offsets = [0, 4, 0], sizes = [4, 8, 128], strides = [1, 1, 1]} : vector<4x12x128xf32> to vector<4x8x128xf32>
    %167 = vector.extract_strided_slice %3 {offsets = [4, 0, 0], sizes = [1, 8, 128], strides = [1, 1, 1]} : vector<5x8x128xf32> to vector<1x8x128xf32>
    %168 = vector.shape_cast %167 : vector<1x8x128xf32> to vector<8x128xf32>
    %169 = vector.shape_cast %168 : vector<8x128xf32> to vector<1x8x128xf32>
    %170 = vector.broadcast %169 : vector<1x8x128xf32> to vector<4x8x128xf32>
    %171 = arith.mulf %166, %170 : vector<4x8x128xf32>
    %172 = arith.addf %165, %171 : vector<4x8x128xf32>
    %173 = vector.extract_strided_slice %5 {offsets = [3, 0, 0], sizes = [1, 8, 128], strides = [1, 1, 1]} : vector<5x8x128xf32> to vector<1x8x128xf32>
    %174 = vector.shape_cast %173 : vector<1x8x128xf32> to vector<8x128xf32>
    %175 = vector.shape_cast %174 : vector<8x128xf32> to vector<1x8x128xf32>
    %176 = vector.broadcast %175 : vector<1x8x128xf32> to vector<4x8x128xf32>
    %177 = arith.mulf %172, %176 : vector<4x8x128xf32>
    %178 = arith.addf %135, %177 : vector<4x8x128xf32>
    %c0_16 = arith.constant 0 : index
    %c0_17 = arith.constant 0 : index
    %179 = arith.index_cast %1 : i32 to index
    %c4 = arith.constant 4 : index
    %180 = vector.load %arg2[%c0_16, %c0_17, %179, %c4] : memref<1x4x20x256xf32, #tpu.memory_space<vmem>>, vector<1x4x12x128xf32>
    %181 = vector.shape_cast %180 : vector<1x4x12x128xf32> to vector<4x12x128xf32>
    %182 = vector.extract_strided_slice %181 {offsets = [0, 0, 0], sizes = [4, 8, 128], strides = [1, 1, 1]} : vector<4x12x128xf32> to vector<4x8x128xf32>
    %183 = vector.extract_strided_slice %3 {offsets = [0, 0, 0], sizes = [1, 8, 128], strides = [1, 1, 1]} : vector<5x8x128xf32> to vector<1x8x128xf32>
    %184 = vector.shape_cast %183 : vector<1x8x128xf32> to vector<8x128xf32>
    %185 = vector.shape_cast %184 : vector<8x128xf32> to vector<1x8x128xf32>
    %186 = vector.broadcast %185 : vector<1x8x128xf32> to vector<4x8x128xf32>
    %187 = arith.mulf %182, %186 : vector<4x8x128xf32>
    %188 = vector.extract_strided_slice %181 {offsets = [0, 1, 0], sizes = [4, 8, 128], strides = [1, 1, 1]} : vector<4x12x128xf32> to vector<4x8x128xf32>
    %189 = vector.extract_strided_slice %3 {offsets = [1, 0, 0], sizes = [1, 8, 128], strides = [1, 1, 1]} : vector<5x8x128xf32> to vector<1x8x128xf32>
    %190 = vector.shape_cast %189 : vector<1x8x128xf32> to vector<8x128xf32>
    %191 = vector.shape_cast %190 : vector<8x128xf32> to vector<1x8x128xf32>
    %192 = vector.broadcast %191 : vector<1x8x128xf32> to vector<4x8x128xf32>
    %193 = arith.mulf %188, %192 : vector<4x8x128xf32>
    %194 = arith.addf %187, %193 : vector<4x8x128xf32>
    %195 = vector.extract_strided_slice %181 {offsets = [0, 2, 0], sizes = [4, 8, 128], strides = [1, 1, 1]} : vector<4x12x128xf32> to vector<4x8x128xf32>
    %196 = vector.extract_strided_slice %3 {offsets = [2, 0, 0], sizes = [1, 8, 128], strides = [1, 1, 1]} : vector<5x8x128xf32> to vector<1x8x128xf32>
    %197 = vector.shape_cast %196 : vector<1x8x128xf32> to vector<8x128xf32>
    %198 = vector.shape_cast %197 : vector<8x128xf32> to vector<1x8x128xf32>
    %199 = vector.broadcast %198 : vector<1x8x128xf32> to vector<4x8x128xf32>
    %200 = arith.mulf %195, %199 : vector<4x8x128xf32>
    %201 = arith.addf %194, %200 : vector<4x8x128xf32>
    %202 = vector.extract_strided_slice %181 {offsets = [0, 3, 0], sizes = [4, 8, 128], strides = [1, 1, 1]} : vector<4x12x128xf32> to vector<4x8x128xf32>
    %203 = vector.extract_strided_slice %3 {offsets = [3, 0, 0], sizes = [1, 8, 128], strides = [1, 1, 1]} : vector<5x8x128xf32> to vector<1x8x128xf32>
    %204 = vector.shape_cast %203 : vector<1x8x128xf32> to vector<8x128xf32>
    %205 = vector.shape_cast %204 : vector<8x128xf32> to vector<1x8x128xf32>
    %206 = vector.broadcast %205 : vector<1x8x128xf32> to vector<4x8x128xf32>
    %207 = arith.mulf %202, %206 : vector<4x8x128xf32>
    %208 = arith.addf %201, %207 : vector<4x8x128xf32>
    %209 = vector.extract_strided_slice %181 {offsets = [0, 4, 0], sizes = [4, 8, 128], strides = [1, 1, 1]} : vector<4x12x128xf32> to vector<4x8x128xf32>
    %210 = vector.extract_strided_slice %3 {offsets = [4, 0, 0], sizes = [1, 8, 128], strides = [1, 1, 1]} : vector<5x8x128xf32> to vector<1x8x128xf32>
    %211 = vector.shape_cast %210 : vector<1x8x128xf32> to vector<8x128xf32>
    %212 = vector.shape_cast %211 : vector<8x128xf32> to vector<1x8x128xf32>
    %213 = vector.broadcast %212 : vector<1x8x128xf32> to vector<4x8x128xf32>
    %214 = arith.mulf %209, %213 : vector<4x8x128xf32>
    %215 = arith.addf %208, %214 : vector<4x8x128xf32>
    %216 = vector.extract_strided_slice %5 {offsets = [4, 0, 0], sizes = [1, 8, 128], strides = [1, 1, 1]} : vector<5x8x128xf32> to vector<1x8x128xf32>
    %217 = vector.shape_cast %216 : vector<1x8x128xf32> to vector<8x128xf32>
    %218 = vector.shape_cast %217 : vector<8x128xf32> to vector<1x8x128xf32>
    %219 = vector.broadcast %218 : vector<1x8x128xf32> to vector<4x8x128xf32>
    %220 = arith.mulf %215, %219 : vector<4x8x128xf32>
    %221 = arith.addf %178, %220 : vector<4x8x128xf32>
    %c0_18 = arith.constant 0 : index
    %c0_19 = arith.constant 0 : index
    %c0_20 = arith.constant 0 : index
    %c0_21 = arith.constant 0 : index
    %222 = vector.load %arg5[%c0_18, %c0_19, %c0_20, %c0_21] : memref<1x4x8x128xf32, #tpu.memory_space<vmem>>, vector<1x4x8x128xf32>
    %223 = vector.shape_cast %222 : vector<1x4x8x128xf32> to vector<4x8x128xf32>
    %224 = vector.shape_cast %221 : vector<4x8x128xf32> to vector<1x4x8x128xf32>
    tpu.vector_store %arg5[%c0_18, %c0_19, %c0_20, %c0_21], %224 {strides = array<i32>} : memref<1x4x8x128xf32, #tpu.memory_space<vmem>>, vector<1x4x8x128xf32>,
    return
  }
  func.func @transform_0(%arg0: i32, %arg1: i32) -> (i32, i32, i32, i32) {
    %c0_i32 = arith.constant 0 : i32
    %c0_i32_0 = arith.constant 0 : i32
    %c0_i32_1 = arith.constant 0 : i32
    %c0_i32_2 = arith.constant 0 : i32
    return %arg0, %c0_i32, %c0_i32_0, %c0_i32_1 : i32, i32, i32, i32
  }
  func.func @transform_1(%arg0: i32, %arg1: i32) -> (i32, i32, i32, i32) {
    %c0_i32 = arith.constant 0 : i32
    %c0_i32_0 = arith.constant 0 : i32
    %c0_i32_1 = arith.constant 0 : i32
    return %arg0, %c0_i32, %arg1, %c0_i32_0 : i32, i32, i32, i32
  }
  func.func @transform_2(%arg0: i32, %arg1: i32) -> (i32, i32, i32, i32) {
    %c0_i32 = arith.constant 0 : i32
    %c0_i32_0 = arith.constant 0 : i32
    %c0_i32_1 = arith.constant 0 : i32
    return %arg0, %c0_i32, %arg1, %c0_i32_0 : i32, i32, i32, i32
  }
  func.func @transform_3(%arg0: i32, %arg1: i32) -> (i32, i32, i32, i32) {
    %c0_i32 = arith.constant 0 : i32
    %c0_i32_0 = arith.constant 0 : i32
    %c0_i32_1 = arith.constant 0 : i32
    return %arg0, %c0_i32, %arg1, %c0_i32_0 : i32, i32, i32, i32
  }
}

</mosaic_0001>

<llo_original>
// kernel: tpu_custom_call.1
$region0: #{tpu_custom_call.1}
  #allocation0 [shape = 'u32[]', space=smem, size = 0x4, offset = 0x4, fixed_abs, tag = 'smem constant byte address 0x4 - core index']
  #allocation1 [shape = 'u32[72,128]{1,0:T(1,128)}', space=vmem, size = 0x9000, scoped, tag = 'internal scratch']
  %s0 = inlined_call_operand.vmem [shape: f32[2,4,20,256], index: 0, kind: input, shape index: {}]
  %s1 = inlined_call_operand.vmem [shape: f32[2,5,16,128], index: 1, kind: input, shape index: {}]
  %s2 = inlined_call_operand.vmem [shape: f32[2,5,16,128], index: 2, kind: input, shape index: {}]
  %s3 = inlined_call_operand.hbm [shape: f32[2,4,16,128], index: 3, kind: output, shape index: {}]
  %s4 = sld [smem:[#allocation0]]
  $region121: #{tpu_custom_call.1} parent=0
    _
  %s6 = ssub.s32 1, %s4
  %s7 = scalar_select 0, %s6, %s4
  $region1: #{tpu_custom_call.1} parent=0
    #allocation2 [shape = 'u8[40960]{0}', space=vmem, size = 0xa000, scoped, tag = 'input window, operand 1']
    #allocation3 [shape = 'u8[40960]{0}', space=vmem, size = 0xa000, scoped, tag = 'input window, operand 2']
    #allocation4 [shape = 'u8[32768]{0}', space=vmem, size = 0x8000, scoped, tag = 'output window, operand 0']
    #allocation5 [shape = 's32[2]{0}', space=sflag, size = 0x8, scoped, tag = 'scoped memory for tpu_custom_call.1']
    %8 = vsyncpa [#allocation5], 0
    %s9 = scalar_lea.sflag [#allocation5], 1
    %10 = vsyncpa %s9, 0
    loop: start=0, step=1, limit=6
    $region2: #{tpu_custom_call.1} parent=1 // loop_pre_header
      _
    $region3: #{tpu_custom_call.1} parent=1 // loop_header
      %s12 = sphi 0, %s16
      %p13 = scmp.ge.s32.totalorder %s12, 6
      %s19 = sphi 0, %s31
      %s20 = sphi 0, %s27
      %s21 = sphi 0, %s19
      %s22 = sphi 0, %s20
      %s23 = sphi 0, %s21
      %s24 = sphi 0, %s22
      %s34 = sphi 0, %s36
      %s37 = sphi 0, %s34
      %s38 = sphi 0, %s37
      %s54 = sphi 0, %s38
      %s62 = sphi 0, %s64
      %s65 = sphi 0, %s62
      %s66 = sphi 0, %s65
      %s82 = sphi 0, %s66
      %s90 = sphi 0, %s92
      %s93 = sphi 0, %s90
      %s94 = sphi 0, %s93
      %s110 = sphi 0, %s94
      %s118 = sphi 0, %s120
      %s121 = sphi 0, %s118
      %s122 = sphi 0, %s121
      %s138 = sphi 0, %s122
    $region4: #{tpu_custom_call.1} parent=1 // loop_header_branch
      %15 = sbr.rel (%p13) target = $region8
    $region5: #{tpu_custom_call.1} parent=1 // loop_body
      %s17 = ssub.s32 %s12, 1
      %s18 = ssub.s32 %s12, 2
      %s25 = sadd.s32 1, %s20
      %p26 = scmp.ge.s32.totalorder %s25, 2
      %s27 = scalar_select %p26, 0, %s25
      %s28 = sadd.s32 1, %s19
      %s29 = scalar_select %p26, %s28, %s19
      %p30 = scmp.ge.s32.totalorder %s29, 2
      %s31 = scalar_select %p30, 0, %s29
      %s32 = ssub.s32 %s19, %s31
      %p33 = scmp.eq.s32.totalorder %s32, 0
      %s35 = sadd.s32 %s34, 1
      %s36 = scalar_select %p33, %s34, %s35
      %p39 = pneg %p33
      %p40 = scmp.eq.s32.totalorder %s12, 3
      %p41 = por %p39, %p40
      %p42 = scmp.ne.s32.totalorder %s34, %s37
      %p43 = scmp.eq.s32.totalorder %s12, 0
      %p44 = por %p42, %p43
      %p45 = scmp.ne.s32.totalorder %s34, %s37
      %p46 = scmp.eq.s32.totalorder %s17, 3
      %p47 = por %p45, %p46
      %p48 = scmp.ne.s32.totalorder %s37, %s38
      %p49 = scmp.eq.s32.totalorder %s17, 0
      %p50 = por %p48, %p49
      %p51 = scmp.ne.s32.totalorder %s37, %s38
      %p52 = scmp.eq.s32.totalorder %s18, 3
      %p53 = por %p51, %p52
      %p55 = scmp.ne.s32.totalorder %s38, %s54
      %p56 = scmp.eq.s32.totalorder %s18, 0
      %p57 = por %p55, %p56
      %s58 = ssub.s32 %s19, %s31
      %s59 = ssub.s32 %s20, %s27
      %s60 = sor.u32 %s58, %s59
      %p61 = scmp.eq.s32.totalorder %s60, 0
      %s63 = sadd.s32 %s62, 1
      %s64 = scalar_select %p61, %s62, %s63
      %p67 = pneg %p61
      %p68 = scmp.eq.s32.totalorder %s12, 3
      %p69 = por %p67, %p68
      %p70 = scmp.ne.s32.totalorder %s62, %s65
      %p71 = scmp.eq.s32.totalorder %s12, 0
      %p72 = por %p70, %p71
      %p73 = scmp.ne.s32.totalorder %s62, %s65
      %p74 = scmp.eq.s32.totalorder %s17, 3
      %p75 = por %p73, %p74
      %p76 = scmp.ne.s32.totalorder %s65, %s66
      %p77 = scmp.eq.s32.totalorder %s17, 0
      %p78 = por %p76, %p77
      %p79 = scmp.ne.s32.totalorder %s65, %s66
      %p80 = scmp.eq.s32.totalorder %s18, 3
      %p81 = por %p79, %p80
      %p83 = scmp.ne.s32.totalorder %s66, %s82
      %p84 = scmp.eq.s32.totalorder %s18, 0
      %p85 = por %p83, %p84
      %s86 = ssub.s32 %s19, %s31
      %s87 = ssub.s32 %s20, %s27
      %s88 = sor.u32 %s86, %s87
      %p89 = scmp.eq.s32.totalorder %s88, 0
      %s91 = sadd.s32 %s90, 1
      %s92 = scalar_select %p89, %s90, %s91
      %p95 = pneg %p89
      %p96 = scmp.eq.s32.totalorder %s12, 3
      %p97 = por %p95, %p96
      %p98 = scmp.ne.s32.totalorder %s90, %s93
      %p99 = scmp.eq.s32.totalorder %s12, 0
      %p100 = por %p98, %p99
      %p101 = scmp.ne.s32.totalorder %s90, %s93
      %p102 = scmp.eq.s32.totalorder %s17, 3
      %p103 = por %p101, %p102
      %p104 = scmp.ne.s32.totalorder %s93, %s94
      %p105 = scmp.eq.s32.totalorder %s17, 0
      %p106 = por %p104, %p105
      %p107 = scmp.ne.s32.totalorder %s93, %s94
      %p108 = scmp.eq.s32.totalorder %s18, 3
      %p109 = por %p107, %p108
      %p111 = scmp.ne.s32.totalorder %s94, %s110
      %p112 = scmp.eq.s32.totalorder %s18, 0
      %p113 = por %p111, %p112
      %s114 = ssub.s32 %s19, %s31
      %s115 = ssub.s32 %s20, %s27
      %s116 = sor.u32 %s114, %s115
      %p117 = scmp.eq.s32.totalorder %s116, 0
      %s119 = sadd.s32 %s118, 1
      %s120 = scalar_select %p117, %s118, %s119
      %p123 = pneg %p117
      %p124 = scmp.eq.s32.totalorder %s12, 3
      %p125 = por %p123, %p124
      %p126 = scmp.ne.s32.totalorder %s118, %s121
      %p127 = scmp.eq.s32.totalorder %s12, 0
      %p128 = por %p126, %p127
      %p129 = scmp.ne.s32.totalorder %s118, %s121
      %p130 = scmp.eq.s32.totalorder %s17, 3
      %p131 = por %p129, %p130
      %p132 = scmp.ne.s32.totalorder %s121, %s122
      %p133 = scmp.eq.s32.totalorder %s17, 0
      %p134 = por %p132, %p133
      %p135 = scmp.ne.s32.totalorder %s121, %s122
      %p136 = scmp.eq.s32.totalorder %s18, 3
      %p137 = por %p135, %p136
      %p139 = scmp.ne.s32.totalorder %s122, %s138
      %p140 = scmp.eq.s32.totalorder %s18, 0
      %p141 = por %p139, %p140
      %p142 = scmp.le.s32.totalorder 1, %s12
      %p143 = scmp.lt.s32.totalorder %s12, 5
      %p144 = pnand %p142, %p143
      %p145 = pneg %p144
      // Predicated region
      $region9: #{tpu_custom_call.1} parent=5 // pred_check
        _
      $region10: #{tpu_custom_call.1} parent=5 // pred_check_branch
        %147 = sbr.rel (%p144) target = $region12
      $region11: #{tpu_custom_call.1} parent=5 // pred_region
        %s148 = ssub.s32 %s12, 1
      $region12: #{tpu_custom_call.1} parent=5 // pred_fallthru
        _
      %p149 = scmp.lt.s32.totalorder %s12, 4
      // Predicated region
      $region13: #{tpu_custom_call.1} parent=5 // pred_check
        %p150 = pneg %p149
      $region14: #{tpu_custom_call.1} parent=5 // pred_check_branch
        %152 = sbr.rel (%p150) target = $region16
      $region15: #{tpu_custom_call.1} parent=5 // pred_region
        // Predicated region
        $region17: #{tpu_custom_call.1} parent=15 // pred_check
          %p153 = pneg %p44
        $region18: #{tpu_custom_call.1} parent=15 // pred_check_branch
          %155 = sbr.rel (%p153) target = $region20
        $region19: #{tpu_custom_call.1} parent=15 // pred_region
          %p156 = scmp.lt.s32.totalorder %s19, 1
          %s157 = scalar_select %p156, %s19, 1
          %s158 = smul.addr %s157, 24
          %s159 = smul.addr %s158, 8
          %s160 = scalar_lea.vmem %s0, %s159
        $region20: #{tpu_custom_call.1} parent=15 // pred_fallthru
          _
        // Predicated region
        $region21: #{tpu_custom_call.1} parent=15 // pred_check
          %p161 = pneg %p72
        $region22: #{tpu_custom_call.1} parent=15 // pred_check_branch
          %163 = sbr.rel (%p161) target = $region24
        $region23: #{tpu_custom_call.1} parent=15 // pred_region
          %s164 = sand.u32 %s62, 1
          %s165 = sand.u32 %s62, 1
          %s166 = smul.addr %s165, 40
          %s167 = scalar_lea.vmem [#allocation2], %s166
          %s168 = smul.addr %s19, 10
          %s169 = sadd.s32 %s20, %s168
          %s170 = smul.addr %s169, 8
          %s171 = scalar_lea.vmem %s1, %s170
          // Predicated region
          $region25: #{tpu_custom_call.1} parent=23 // pred_check
            _
          $region26: #{tpu_custom_call.1} parent=23 // pred_check_branch
            %173 = sbr.rel (0) target = $region28
          $region27: #{tpu_custom_call.1} parent=23 // pred_region
            // Predicated region
            $region29: #{tpu_custom_call.1} parent=27 // pred_check
              _
            $region30: #{tpu_custom_call.1} parent=27 // pred_check_branch
              %175 = sbr.rel (0) target = $region32
            $region31: #{tpu_custom_call.1} parent=27 // pred_region
              // Predicated region
              $region44: #{tpu_custom_call.1} parent=31 // pred_check
                _
              $region45: #{tpu_custom_call.1} parent=31 // pred_check_branch
                %199 = sbr.rel (0) target = $region47
              $region46: #{tpu_custom_call.1} parent=31 // pred_region
                loop: start=0, step=1, limit=1
                $region48: #{tpu_custom_call.1} parent=46 // loop_pre_header
                  _
                $region49: #{tpu_custom_call.1} parent=46 // loop_header
                  %s201 = sphi 0, %s205
                  %p202 = scmp.ge.s32.totalorder %s201, 1
                  %s206 = sphi %s171, %s171
                  %s207 = sphi %s167, %s167
                $region50: #{tpu_custom_call.1} parent=46 // loop_header_branch
                  %204 = sbr.rel (%p202) target = $region54
                $region51: #{tpu_custom_call.1} parent=46 // loop_body
                  %v208 = vld [vmem:[%s206] sm:$0xff]
                  %209 = vst [vmem:[%s207] sm:$0xff] %v208
                  %v210 = vld [vmem:[%s206 + $0x10] sm:$0xff]
                  %211 = vst [vmem:[%s207 + $0x8] sm:$0xff] %v210
                  %v212 = vld [vmem:[%s206 + $0x20] sm:$0xff]
                  %213 = vst [vmem:[%s207 + $0x10] sm:$0xff] %v212
                  %v214 = vld [vmem:[%s206 + $0x30] sm:$0xff]
                  %215 = vst [vmem:[%s207 + $0x18] sm:$0xff] %v214
                  %v216 = vld [vmem:[%s206 + $0x40] sm:$0xff]
                  %217 = vst [vmem:[%s207 + $0x20] sm:$0xff] %v216
                $region52: #{tpu_custom_call.1} parent=46 // loop_footer
                  %s205 = sadd.s32 1, %s201
                $region53: #{tpu_custom_call.1} parent=46 // loop_footer_branch
                  %200 = sbr.rel target = $region49
                $region54: #{tpu_custom_call.1} parent=46 // loop_exit
                  _
              $region47: #{tpu_custom_call.1} parent=31 // pred_fallthru
                _
              // Predicated region
              $region55: #{tpu_custom_call.1} parent=31 // pred_check
                _
              $region56: #{tpu_custom_call.1} parent=31 // pred_check_branch
                %219 = sbr.rel target = $region58
              $region57: #{tpu_custom_call.1} parent=31 // pred_region
                _
              $region58: #{tpu_custom_call.1} parent=31 // pred_fallthru
                _
            $region32: #{tpu_custom_call.1} parent=27 // pred_fallthru
              _
            // Predicated region
            $region33: #{tpu_custom_call.1} parent=27 // pred_check
              _
            $region34: #{tpu_custom_call.1} parent=27 // pred_check_branch
              %177 = sbr.rel target = $region36
            $region35: #{tpu_custom_call.1} parent=27 // pred_region
              %s179 = ssub.s32 256, 1
              loop: start=0, step=1, limit=1
              $region37: #{tpu_custom_call.1} parent=35 // loop_pre_header
                _
              $region38: #{tpu_custom_call.1} parent=35 // loop_header
                %s181 = sphi 0, %s185
                %p182 = scmp.ge.s32.totalorder %s181, 1
                %s186 = sphi %s171, %s171
                %s187 = sphi %s167, %s167
              $region39: #{tpu_custom_call.1} parent=35 // loop_header_branch
                %184 = sbr.rel (%p182) target = $region43
              $region40: #{tpu_custom_call.1} parent=35 // loop_body
                %v188 = vld [vmem:[%s186] sm:%s179]
                %189 = vst [vmem:[%s187] sm:%s179] %v188
                %v190 = vld [vmem:[%s186 + $0x10] sm:%s179]
                %191 = vst [vmem:[%s187 + $0x8] sm:%s179] %v190
                %v192 = vld [vmem:[%s186 + $0x20] sm:%s179]
                %193 = vst [vmem:[%s187 + $0x10] sm:%s179] %v192
                %v194 = vld [vmem:[%s186 + $0x30] sm:%s179]
                %195 = vst [vmem:[%s187 + $0x18] sm:%s179] %v194
                %v196 = vld [vmem:[%s186 + $0x40] sm:%s179]
                %197 = vst [vmem:[%s187 + $0x20] sm:%s179] %v196
              $region41: #{tpu_custom_call.1} parent=35 // loop_footer
                %s185 = sadd.s32 1, %s181
              $region42: #{tpu_custom_call.1} parent=35 // loop_footer_branch
                %180 = sbr.rel target = $region38
              $region43: #{tpu_custom_call.1} parent=35 // loop_exit
                _
            $region36: #{tpu_custom_call.1} parent=27 // pred_fallthru
              _
          $region28: #{tpu_custom_call.1} parent=23 // pred_fallthru
            _
          %220 = vnop
        $region24: #{tpu_custom_call.1} parent=15 // pred_fallthru
          _
        // Predicated region
        $region59: #{tpu_custom_call.1} parent=15 // pred_check
          %p221 = pneg %p100
        $region60: #{tpu_custom_call.1} parent=15 // pred_check_branch
          %223 = sbr.rel (%p221) target = $region62
        $region61: #{tpu_custom_call.1} parent=15 // pred_region
          %s224 = sand.u32 %s90, 1
          %s225 = sand.u32 %s90, 1
          %s226 = smul.addr %s225, 40
          %s227 = scalar_lea.vmem [#allocation3], %s226
          %s228 = smul.addr %s19, 10
          %s229 = sadd.s32 %s20, %s228
          %s230 = smul.addr %s229, 8
          %s231 = scalar_lea.vmem %s2, %s230
          // Predicated region
          $region63: #{tpu_custom_call.1} parent=61 // pred_check
            _
          $region64: #{tpu_custom_call.1} parent=61 // pred_check_branch
            %233 = sbr.rel (0) target = $region66
          $region65: #{tpu_custom_call.1} parent=61 // pred_region
            // Predicated region
            $region67: #{tpu_custom_call.1} parent=65 // pred_check
              _
            $region68: #{tpu_custom_call.1} parent=65 // pred_check_branch
              %235 = sbr.rel (0) target = $region70
            $region69: #{tpu_custom_call.1} parent=65 // pred_region
              // Predicated region
              $region82: #{tpu_custom_call.1} parent=69 // pred_check
                _
              $region83: #{tpu_custom_call.1} parent=69 // pred_check_branch
                %259 = sbr.rel (0) target = $region85
              $region84: #{tpu_custom_call.1} parent=69 // pred_region
                loop: start=0, step=1, limit=1
                $region86: #{tpu_custom_call.1} parent=84 // loop_pre_header
                  _
                $region87: #{tpu_custom_call.1} parent=84 // loop_header
                  %s261 = sphi 0, %s265
                  %p262 = scmp.ge.s32.totalorder %s261, 1
                  %s266 = sphi %s231, %s231
                  %s267 = sphi %s227, %s227
                $region88: #{tpu_custom_call.1} parent=84 // loop_header_branch
                  %264 = sbr.rel (%p262) target = $region92
                $region89: #{tpu_custom_call.1} parent=84 // loop_body
                  %v268 = vld [vmem:[%s266] sm:$0xff]
                  %269 = vst [vmem:[%s267] sm:$0xff] %v268
                  %v270 = vld [vmem:[%s266 + $0x10] sm:$0xff]
                  %271 = vst [vmem:[%s267 + $0x8] sm:$0xff] %v270
                  %v272 = vld [vmem:[%s266 + $0x20] sm:$0xff]
                  %273 = vst [vmem:[%s267 + $0x10] sm:$0xff] %v272
                  %v274 = vld [vmem:[%s266 + $0x30] sm:$0xff]
                  %275 = vst [vmem:[%s267 + $0x18] sm:$0xff] %v274
                  %v276 = vld [vmem:[%s266 + $0x40] sm:$0xff]
                  %277 = vst [vmem:[%s267 + $0x20] sm:$0xff] %v276
                $region90: #{tpu_custom_call.1} parent=84 // loop_footer
                  %s265 = sadd.s32 1, %s261
                $region91: #{tpu_custom_call.1} parent=84 // loop_footer_branch
                  %260 = sbr.rel target = $region87
                $region92: #{tpu_custom_call.1} parent=84 // loop_exit
                  _
              $region85: #{tpu_custom_call.1} parent=69 // pred_fallthru
                _
              // Predicated region
              $region93: #{tpu_custom_call.1} parent=69 // pred_check
                _
              $region94: #{tpu_custom_call.1} parent=69 // pred_check_branch
                %279 = sbr.rel target = $region96
              $region95: #{tpu_custom_call.1} parent=69 // pred_region
                _
              $region96: #{tpu_custom_call.1} parent=69 // pred_fallthru
                _
            $region70: #{tpu_custom_call.1} parent=65 // pred_fallthru
              _
            // Predicated region
            $region71: #{tpu_custom_call.1} parent=65 // pred_check
              _
            $region72: #{tpu_custom_call.1} parent=65 // pred_check_branch
              %237 = sbr.rel target = $region74
            $region73: #{tpu_custom_call.1} parent=65 // pred_region
              %s239 = ssub.s32 256, 1
              loop: start=0, step=1, limit=1
              $region75: #{tpu_custom_call.1} parent=73 // loop_pre_header
                _
              $region76: #{tpu_custom_call.1} parent=73 // loop_header
                %s241 = sphi 0, %s245
                %p242 = scmp.ge.s32.totalorder %s241, 1
                %s246 = sphi %s231, %s231
                %s247 = sphi %s227, %s227
              $region77: #{tpu_custom_call.1} parent=73 // loop_header_branch
                %244 = sbr.rel (%p242) target = $region81
              $region78: #{tpu_custom_call.1} parent=73 // loop_body
                %v248 = vld [vmem:[%s246] sm:%s239]
                %249 = vst [vmem:[%s247] sm:%s239] %v248
                %v250 = vld [vmem:[%s246 + $0x10] sm:%s239]
                %251 = vst [vmem:[%s247 + $0x8] sm:%s239] %v250
                %v252 = vld [vmem:[%s246 + $0x20] sm:%s239]
                %253 = vst [vmem:[%s247 + $0x10] sm:%s239] %v252
                %v254 = vld [vmem:[%s246 + $0x30] sm:%s239]
                %255 = vst [vmem:[%s247 + $0x18] sm:%s239] %v254
                %v256 = vld [vmem:[%s246 + $0x40] sm:%s239]
                %257 = vst [vmem:[%s247 + $0x20] sm:%s239] %v256
              $region79: #{tpu_custom_call.1} parent=73 // loop_footer
                %s245 = sadd.s32 1, %s241
              $region80: #{tpu_custom_call.1} parent=73 // loop_footer_branch
                %240 = sbr.rel target = $region76
              $region81: #{tpu_custom_call.1} parent=73 // loop_exit
                _
            $region74: #{tpu_custom_call.1} parent=65 // pred_fallthru
              _
          $region66: #{tpu_custom_call.1} parent=61 // pred_fallthru
            _
          %280 = vnop
        $region62: #{tpu_custom_call.1} parent=15 // pred_fallthru
          _
      $region16: #{tpu_custom_call.1} parent=5 // pred_fallthru
        _
      %p281 = scmp.le.s32.totalorder 1, %s12
      %p282 = scmp.lt.s32.totalorder %s12, 5
      %p283 = pnand %p281, %p282
      %p284 = pneg %p283
      // Predicated region
      $region97: #{tpu_custom_call.1} parent=5 // pred_check
        _
      $region98: #{tpu_custom_call.1} parent=5 // pred_check_branch
        %286 = sbr.rel (%p283) target = $region100
      $region99: #{tpu_custom_call.1} parent=5 // pred_region
        %s287 = ssub.s32 %s12, 1
        %s288 = sand.u32 %s65, 1
        %s289 = sand.u32 %s65, 1
        %s290 = smul.addr %s289, 40
        %s291 = scalar_lea.vmem [#allocation2], %s290
        // Predicated region
        $region101: #{tpu_custom_call.1} parent=99 // pred_check
          %p292 = pneg %p78
        $region102: #{tpu_custom_call.1} parent=99 // pred_check_branch
          %294 = sbr.rel (%p292) target = $region104
        $region103: #{tpu_custom_call.1} parent=99 // pred_region
          _
        $region104: #{tpu_custom_call.1} parent=99 // pred_fallthru
          _
        %s295 = sand.u32 %s93, 1
        %s296 = sand.u32 %s93, 1
        %s297 = smul.addr %s296, 40
        %s298 = scalar_lea.vmem [#allocation3], %s297
        // Predicated region
        $region105: #{tpu_custom_call.1} parent=99 // pred_check
          %p299 = pneg %p106
        $region106: #{tpu_custom_call.1} parent=99 // pred_check_branch
          %301 = sbr.rel (%p299) target = $region108
        $region107: #{tpu_custom_call.1} parent=99 // pred_region
          _
        $region108: #{tpu_custom_call.1} parent=99 // pred_fallthru
          _
        %p302 = scmp.lt.s32.totalorder %s21, 1
        %s303 = scalar_select %p302, %s21, 1
        %s304 = smul.addr %s303, 24
        %s305 = smul.addr %s304, 8
        %s306 = scalar_lea.vmem %s0, %s305
        %p307 = pneg %p50
        %p308 = pneg %p47
        %s309 = sand.u32 %s65, 1
        %s310 = sand.u32 %s65, 1
        %s311 = smul.addr %s310, 40
        %s312 = scalar_lea.vmem [#allocation2], %s311
        %p313 = pneg %p78
        %p314 = pneg %p75
        %s315 = sand.u32 %s93, 1
        %s316 = sand.u32 %s93, 1
        %s317 = smul.addr %s316, 40
        %s318 = scalar_lea.vmem [#allocation3], %s317
        %p319 = pneg %p106
        %p320 = pneg %p103
        %p321 = pneg %p134
        %p322 = pneg %p131
        %s323 = sand.u32 %s121, 1
        %s324 = scalar_lea.sflag [#allocation5], %s323
        %s325 = sand.u32 %s121, 1
        %s326 = smul.addr %s325, 32
        %s327 = scalar_lea.vmem [#allocation4], %s326
        %p328 = scmp.lt.s32.totalorder %s21, 1
        %s329 = scalar_select %p328, %s21, 1
        %s330 = smul.addr %s329, 24
        %s331 = smul.addr %s330, 8
        %s332 = scalar_lea.vmem %s0, %s331
        %s333 = smul.u32 %s22, 8
        %v334 = vld [vmem:[%s291] sm:$0xff]
        %v335 = vld [vmem:[%s291 + $0x8] sm:$0xff]
        %v336 = vld [vmem:[%s291 + $0x10] sm:$0xff]
        %v337 = vld [vmem:[%s291 + $0x18] sm:$0xff]
        %v338 = vld [vmem:[%s291 + $0x20] sm:$0xff]
        %v339 = vld [vmem:[%s298] sm:$0xff]
        %v340 = vld [vmem:[%s298 + $0x8] sm:$0xff]
        %v341 = vld [vmem:[%s298 + $0x10] sm:$0xff]
        %v342 = vld [vmem:[%s298 + $0x18] sm:$0xff]
        %v343 = vld [vmem:[%s298 + $0x20] sm:$0xff]
        %s344 = sshra.s32 %s333, 3
        %s345 = sand.u32 %s333, 7
        %s346 = smul.u32 %s344, 2
        %s347 = smul.addr %s346, 8
        %s348 = scalar_lea.vmem %s332, %s347
        %v349 = vld [vmem:[%s348] sm:$0xff]
        %v350 = vld [vmem:[%s348 + $0x10] sm:$0xf]
        %v351 = vld [vmem:[%s348 + $0x30] sm:$0xff]
        %v352 = vld [vmem:[%s348 + $0x40] sm:$0xf]
        %v353 = vld [vmem:[%s348 + $0x60] sm:$0xff]
        %v354 = vld [vmem:[%s348 + $0x70] sm:$0xf]
        %v355 = vld [vmem:[%s348 + $0x90] sm:$0xff]
        %v356 = vld [vmem:[%s348 + $0xa0] sm:$0xf]
        %v357 = vmul.f32 %v349, %v334
        %v358 = vmul.f32 %v351, %v334
        %v359 = vmul.f32 %v353, %v334
        %v360 = vmul.f32 %v355, %v334
        %v362 = vrot.slane %v335, 7
        %v364 = vmul.f32 %v349, %v362
        %v365 = vmul.f32 %v350, %v362
        %v366 = vmul.f32 %v351, %v362
        %v367 = vmul.f32 %v352, %v362
        %v368 = vmul.f32 %v353, %v362
        %v369 = vmul.f32 %v354, %v362
        %v370 = vmul.f32 %v355, %v362
        %v371 = vmul.f32 %v356, %v362
        %vm380 = vcmask 1046528
        %v381 = vrot.slane %v364, 1
        %v382 = vrot.slane %v365, 1
        %v383 = vsel %vm380, %v381, %v382
        %v384 = vrot.slane %v366, 1
        %v385 = vrot.slane %v367, 1
        %v386 = vsel %vm380, %v384, %v385
        %v387 = vrot.slane %v368, 1
        %v388 = vrot.slane %v369, 1
        %v389 = vsel %vm380, %v387, %v388
        %v390 = vrot.slane %v370, 1
        %v391 = vrot.slane %v371, 1
        %v392 = vsel %vm380, %v390, %v391
        %v397 = vadd.f32 %v357, %v383
        %v398 = vadd.f32 %v358, %v386
        %v399 = vadd.f32 %v359, %v389
        %v400 = vadd.f32 %v360, %v392
        %v402 = vrot.slane %v336, 6
        %v404 = vmul.f32 %v349, %v402
        %v405 = vmul.f32 %v350, %v402
        %v406 = vmul.f32 %v351, %v402
        %v407 = vmul.f32 %v352, %v402
        %v408 = vmul.f32 %v353, %v402
        %v409 = vmul.f32 %v354, %v402
        %v410 = vmul.f32 %v355, %v402
        %v411 = vmul.f32 %v356, %v402
        %vm420 = vcmask 1045504
        %v421 = vrot.slane %v404, 2
        %v422 = vrot.slane %v405, 2
        %v423 = vsel %vm420, %v421, %v422
        %v424 = vrot.slane %v406, 2
        %v425 = vrot.slane %v407, 2
        %v426 = vsel %vm420, %v424, %v425
        %v427 = vrot.slane %v408, 2
        %v428 = vrot.slane %v409, 2
        %v429 = vsel %vm420, %v427, %v428
        %v430 = vrot.slane %v410, 2
        %v431 = vrot.slane %v411, 2
        %v432 = vsel %vm420, %v430, %v431
        %v437 = vadd.f32 %v397, %v423
        %v438 = vadd.f32 %v398, %v426
        %v439 = vadd.f32 %v399, %v429
        %v440 = vadd.f32 %v400, %v432
        %v442 = vrot.slane %v337, 5
        %v444 = vmul.f32 %v349, %v442
        %v445 = vmul.f32 %v350, %v442
        %v446 = vmul.f32 %v351, %v442
        %v447 = vmul.f32 %v352, %v442
        %v448 = vmul.f32 %v353, %v442
        %v449 = vmul.f32 %v354, %v442
        %v450 = vmul.f32 %v355, %v442
        %v451 = vmul.f32 %v356, %v442
        %vm460 = vcmask 1044480
        %v461 = vrot.slane %v444, 3
        %v462 = vrot.slane %v445, 3
        %v463 = vsel %vm460, %v461, %v462
        %v464 = vrot.slane %v446, 3
        %v465 = vrot.slane %v447, 3
        %v466 = vsel %vm460, %v464, %v465
        %v467 = vrot.slane %v448, 3
        %v468 = vrot.slane %v449, 3
        %v469 = vsel %vm460, %v467, %v468
        %v470 = vrot.slane %v450, 3
        %v471 = vrot.slane %v451, 3
        %v472 = vsel %vm460, %v470, %v471
        %v477 = vadd.f32 %v437, %v463
        %v478 = vadd.f32 %v438, %v466
        %v479 = vadd.f32 %v439, %v469
        %v480 = vadd.f32 %v440, %v472
        %v482 = vrot.slane %v338, 4
        %v484 = vmul.f32 %v349, %v482
        %v485 = vmul.f32 %v350, %v482
        %v486 = vmul.f32 %v351, %v482
        %v487 = vmul.f32 %v352, %v482
        %v488 = vmul.f32 %v353, %v482
        %v489 = vmul.f32 %v354, %v482
        %v490 = vmul.f32 %v355, %v482
        %v491 = vmul.f32 %v356, %v482
        %vm500 = vcmask 1043456
        %v501 = vrot.slane %v484, 4
        %v502 = vrot.slane %v485, 4
        %v503 = vsel %vm500, %v501, %v502
        %v504 = vrot.slane %v486, 4
        %v505 = vrot.slane %v487, 4
        %v506 = vsel %vm500, %v504, %v505
        %v507 = vrot.slane %v488, 4
        %v508 = vrot.slane %v489, 4
        %v509 = vsel %vm500, %v507, %v508
        %v510 = vrot.slane %v490, 4
        %v511 = vrot.slane %v491, 4
        %v512 = vsel %vm500, %v510, %v511
        %v517 = vadd.f32 %v477, %v503
        %v518 = vadd.f32 %v478, %v506
        %v519 = vadd.f32 %v479, %v509
        %v520 = vadd.f32 %v480, %v512
        %v521 = vmul.f32 %v517, %v339
        %v522 = vmul.f32 %v518, %v339
        %v523 = vmul.f32 %v519, %v339
        %v524 = vmul.f32 %v520, %v339
        %v525 = vadd.f32 %v521, 0.0
        %v526 = vadd.f32 %v522, 0.0
        %v527 = vadd.f32 %v523, 0.0
        %v528 = vadd.f32 %v524, 0.0
        %v529 = vld [vmem:[%s348 + $0x8] sm:$0xff]
        %v530 = vld [vmem:[%s348 + $0x18] sm:$0xf]
        %v531 = vld [vmem:[%s348 + $0x38] sm:$0xff]
        %v532 = vld [vmem:[%s348 + $0x48] sm:$0xf]
        %v533 = vld [vmem:[%s348 + $0x68] sm:$0xff]
        %v534 = vld [vmem:[%s348 + $0x78] sm:$0xf]
        %v535 = vld [vmem:[%s348 + $0x98] sm:$0xff]
        %v536 = vld [vmem:[%s348 + $0xa8] sm:$0xf]
        %538 = vrot.lane.b32.xlu0 %v334, 1
        %v539 = vpop.permute.xlu0 %538
        %v541 = vmul.f32 %v349, %v539
        %v542 = vmul.f32 %v529, %v539
        %v543 = vmul.f32 %v351, %v539
        %v544 = vmul.f32 %v531, %v539
        %v545 = vmul.f32 %v353, %v539
        %v546 = vmul.f32 %v533, %v539
        %v547 = vmul.f32 %v355, %v539
        %v548 = vmul.f32 %v535, %v539
        %549 = vrot.lane.b32.xlu0 %v362, 1
        %v550 = vpop.permute.xlu0 %549
        %v552 = vmul.f32 %v349, %v550
        %v553 = vmul.f32 %v529, %v550
        %v554 = vmul.f32 %v350, %v550
        %v555 = vmul.f32 %v530, %v550
        %v556 = vmul.f32 %v351, %v550
        %v557 = vmul.f32 %v531, %v550
        %v558 = vmul.f32 %v352, %v550
        %v559 = vmul.f32 %v532, %v550
        %v560 = vmul.f32 %v353, %v550
        %v561 = vmul.f32 %v533, %v550
        %v562 = vmul.f32 %v354, %v550
        %v563 = vmul.f32 %v534, %v550
        %v564 = vmul.f32 %v355, %v550
        %v565 = vmul.f32 %v535, %v550
        %v566 = vmul.f32 %v356, %v550
        %v567 = vmul.f32 %v536, %v550
        %v584 = vrot.slane %v552, 1
        %v585 = vrot.slane %v554, 1
        %v586 = vsel %vm380, %v584, %v585
        %v587 = vrot.slane %v553, 1
        %v588 = vrot.slane %v555, 1
        %v589 = vsel %vm380, %v587, %v588
        %v590 = vrot.slane %v556, 1
        %v591 = vrot.slane %v558, 1
        %v592 = vsel %vm380, %v590, %v591
        %v593 = vrot.slane %v557, 1
        %v594 = vrot.slane %v559, 1
        %v595 = vsel %vm380, %v593, %v594
        %v596 = vrot.slane %v560, 1
        %v597 = vrot.slane %v562, 1
        %v598 = vsel %vm380, %v596, %v597
        %v599 = vrot.slane %v561, 1
        %v600 = vrot.slane %v563, 1
        %v601 = vsel %vm380, %v599, %v600
        %v602 = vrot.slane %v564, 1
        %v603 = vrot.slane %v566, 1
        %v604 = vsel %vm380, %v602, %v603
        %v605 = vrot.slane %v565, 1
        %v606 = vrot.slane %v567, 1
        %v607 = vsel %vm380, %v605, %v606
        %v616 = vadd.f32 %v541, %v586
        %v617 = vadd.f32 %v542, %v589
        %v618 = vadd.f32 %v543, %v592
        %v619 = vadd.f32 %v544, %v595
        %v620 = vadd.f32 %v545, %v598
        %v621 = vadd.f32 %v546, %v601
        %v622 = vadd.f32 %v547, %v604
        %v623 = vadd.f32 %v548, %v607
        %624 = vrot.lane.b32.xlu0 %v402, 1
        %v625 = vpop.permute.xlu0 %624
        %v627 = vmul.f32 %v349, %v625
        %v628 = vmul.f32 %v529, %v625
        %v629 = vmul.f32 %v350, %v625
        %v630 = vmul.f32 %v530, %v625
        %v631 = vmul.f32 %v351, %v625
        %v632 = vmul.f32 %v531, %v625
        %v633 = vmul.f32 %v352, %v625
        %v634 = vmul.f32 %v532, %v625
        %v635 = vmul.f32 %v353, %v625
        %v636 = vmul.f32 %v533, %v625
        %v637 = vmul.f32 %v354, %v625
        %v638 = vmul.f32 %v534, %v625
        %v639 = vmul.f32 %v355, %v625
        %v640 = vmul.f32 %v535, %v625
        %v641 = vmul.f32 %v356, %v625
        %v642 = vmul.f32 %v536, %v625
        %v659 = vrot.slane %v627, 2
        %v660 = vrot.slane %v629, 2
        %v661 = vsel %vm420, %v659, %v660
        %v662 = vrot.slane %v628, 2
        %v663 = vrot.slane %v630, 2
        %v664 = vsel %vm420, %v662, %v663
        %v665 = vrot.slane %v631, 2
        %v666 = vrot.slane %v633, 2
        %v667 = vsel %vm420, %v665, %v666
        %v668 = vrot.slane %v632, 2
        %v669 = vrot.slane %v634, 2
        %v670 = vsel %vm420, %v668, %v669
        %v671 = vrot.slane %v635, 2
        %v672 = vrot.slane %v637, 2
        %v673 = vsel %vm420, %v671, %v672
        %v674 = vrot.slane %v636, 2
        %v675 = vrot.slane %v638, 2
        %v676 = vsel %vm420, %v674, %v675
        %v677 = vrot.slane %v639, 2
        %v678 = vrot.slane %v641, 2
        %v679 = vsel %vm420, %v677, %v678
        %v680 = vrot.slane %v640, 2
        %v681 = vrot.slane %v642, 2
        %v682 = vsel %vm420, %v680, %v681
        %v691 = vadd.f32 %v616, %v661
        %v692 = vadd.f32 %v617, %v664
        %v693 = vadd.f32 %v618, %v667
        %v694 = vadd.f32 %v619, %v670
        %v695 = vadd.f32 %v620, %v673
        %v696 = vadd.f32 %v621, %v676
        %v697 = vadd.f32 %v622, %v679
        %v698 = vadd.f32 %v623, %v682
        %699 = vrot.lane.b32.xlu0 %v442, 1
        %v700 = vpop.permute.xlu0 %699
        %v702 = vmul.f32 %v349, %v700
        %v703 = vmul.f32 %v529, %v700
        %v704 = vmul.f32 %v350, %v700
        %v705 = vmul.f32 %v530, %v700
        %v706 = vmul.f32 %v351, %v700
        %v707 = vmul.f32 %v531, %v700
        %v708 = vmul.f32 %v352, %v700
        %v709 = vmul.f32 %v532, %v700
        %v710 = vmul.f32 %v353, %v700
        %v711 = vmul.f32 %v533, %v700
        %v712 = vmul.f32 %v354, %v700
        %v713 = vmul.f32 %v534, %v700
        %v714 = vmul.f32 %v355, %v700
        %v715 = vmul.f32 %v535, %v700
        %v716 = vmul.f32 %v356, %v700
        %v717 = vmul.f32 %v536, %v700
        %v734 = vrot.slane %v702, 3
        %v735 = vrot.slane %v704, 3
        %v736 = vsel %vm460, %v734, %v735
        %v737 = vrot.slane %v703, 3
        %v738 = vrot.slane %v705, 3
        %v739 = vsel %vm460, %v737, %v738
        %v740 = vrot.slane %v706, 3
        %v741 = vrot.slane %v708, 3
        %v742 = vsel %vm460, %v740, %v741
        %v743 = vrot.slane %v707, 3
        %v744 = vrot.slane %v709, 3
        %v745 = vsel %vm460, %v743, %v744
        %v746 = vrot.slane %v710, 3
        %v747 = vrot.slane %v712, 3
        %v748 = vsel %vm460, %v746, %v747
        %v749 = vrot.slane %v711, 3
        %v750 = vrot.slane %v713, 3
        %v751 = vsel %vm460, %v749, %v750
        %v752 = vrot.slane %v714, 3
        %v753 = vrot.slane %v716, 3
        %v754 = vsel %vm460, %v752, %v753
        %v755 = vrot.slane %v715, 3
        %v756 = vrot.slane %v717, 3
        %v757 = vsel %vm460, %v755, %v756
        %v766 = vadd.f32 %v691, %v736
        %v767 = vadd.f32 %v692, %v739
        %v768 = vadd.f32 %v693, %v742
        %v769 = vadd.f32 %v694, %v745
        %v770 = vadd.f32 %v695, %v748
        %v771 = vadd.f32 %v696, %v751
        %v772 = vadd.f32 %v697, %v754
        %v773 = vadd.f32 %v698, %v757
        %774 = vrot.lane.b32.xlu0 %v482, 1
        %v775 = vpop.permute.xlu0 %774
        %v777 = vmul.f32 %v349, %v775
        %v778 = vmul.f32 %v529, %v775
        %v779 = vmul.f32 %v350, %v775
        %v780 = vmul.f32 %v530, %v775
        %v781 = vmul.f32 %v351, %v775
        %v782 = vmul.f32 %v531, %v775
        %v783 = vmul.f32 %v352, %v775
        %v784 = vmul.f32 %v532, %v775
        %v785 = vmul.f32 %v353, %v775
        %v786 = vmul.f32 %v533, %v775
        %v787 = vmul.f32 %v354, %v775
        %v788 = vmul.f32 %v534, %v775
        %v789 = vmul.f32 %v355, %v775
        %v790 = vmul.f32 %v535, %v775
        %v791 = vmul.f32 %v356, %v775
        %v792 = vmul.f32 %v536, %v775
        %v809 = vrot.slane %v777, 4
        %v810 = vrot.slane %v779, 4
        %v811 = vsel %vm500, %v809, %v810
        %v812 = vrot.slane %v778, 4
        %v813 = vrot.slane %v780, 4
        %v814 = vsel %vm500, %v812, %v813
        %v815 = vrot.slane %v781, 4
        %v816 = vrot.slane %v783, 4
        %v817 = vsel %vm500, %v815, %v816
        %v818 = vrot.slane %v782, 4
        %v819 = vrot.slane %v784, 4
        %v820 = vsel %vm500, %v818, %v819
        %v821 = vrot.slane %v785, 4
        %v822 = vrot.slane %v787, 4
        %v823 = vsel %vm500, %v821, %v822
        %v824 = vrot.slane %v786, 4
        %v825 = vrot.slane %v788, 4
        %v826 = vsel %vm500, %v824, %v825
        %v827 = vrot.slane %v789, 4
        %v828 = vrot.slane %v791, 4
        %v829 = vsel %vm500, %v827, %v828
        %v830 = vrot.slane %v790, 4
        %v831 = vrot.slane %v792, 4
        %v832 = vsel %vm500, %v830, %v831
        %v841 = vadd.f32 %v766, %v811
        %v842 = vadd.f32 %v767, %v814
        %v843 = vadd.f32 %v768, %v817
        %v844 = vadd.f32 %v769, %v820
        %v845 = vadd.f32 %v770, %v823
        %v846 = vadd.f32 %v771, %v826
        %v847 = vadd.f32 %v772, %v829
        %v848 = vadd.f32 %v773, %v832
        %850 = vrot.lane.b32.xlu0 %v340, 1
        %v851 = vpop.permute.xlu0 %850
        %v853 = vmul.f32 %v841, %v851
        %v854 = vmul.f32 %v842, %v851
        %v855 = vmul.f32 %v843, %v851
        %v856 = vmul.f32 %v844, %v851
        %v857 = vmul.f32 %v845, %v851
        %v858 = vmul.f32 %v846, %v851
        %v859 = vmul.f32 %v847, %v851
        %v860 = vmul.f32 %v848, %v851
        %869 = vrot.lane.b32.xlu0 %v853, 127
        %v870 = vpop.permute.xlu0 %869
        %871 = vrot.lane.b32.xlu0 %v854, 127
        %v872 = vpop.permute.xlu0 %871
        %873 = vrot.lane.b32.xlu0 %v855, 127
        %v874 = vpop.permute.xlu0 %873
        %875 = vrot.lane.b32.xlu0 %v856, 127
        %v876 = vpop.permute.xlu0 %875
        %877 = vrot.lane.b32.xlu0 %v857, 127
        %v878 = vpop.permute.xlu0 %877
        %879 = vrot.lane.b32.xlu0 %v858, 127
        %v880 = vpop.permute.xlu0 %879
        %881 = vrot.lane.b32.xlu0 %v859, 127
        %v882 = vpop.permute.xlu0 %881
        %883 = vrot.lane.b32.xlu0 %v860, 127
        %v884 = vpop.permute.xlu0 %883
        %vm885 = vcmask 1039360
        %v886 = vsel %vm885, %v870, %v872
        %v887 = vsel %vm885, %v874, %v876
        %v888 = vsel %vm885, %v878, %v880
        %v889 = vsel %vm885, %v882, %v884
        %v894 = vadd.f32 %v525, %v886
        %v895 = vadd.f32 %v526, %v887
        %v896 = vadd.f32 %v527, %v888
        %v897 = vadd.f32 %v528, %v889
        %898 = vrot.lane.b32.xlu0 %v334, 2
        %v899 = vpop.permute.xlu0 %898
        %v901 = vmul.f32 %v349, %v899
        %v902 = vmul.f32 %v529, %v899
        %v903 = vmul.f32 %v351, %v899
        %v904 = vmul.f32 %v531, %v899
        %v905 = vmul.f32 %v353, %v899
        %v906 = vmul.f32 %v533, %v899
        %v907 = vmul.f32 %v355, %v899
        %v908 = vmul.f32 %v535, %v899
        %909 = vrot.lane.b32.xlu0 %v362, 2
        %v910 = vpop.permute.xlu0 %909
        %v912 = vmul.f32 %v349, %v910
        %v913 = vmul.f32 %v529, %v910
        %v914 = vmul.f32 %v350, %v910
        %v915 = vmul.f32 %v530, %v910
        %v916 = vmul.f32 %v351, %v910
        %v917 = vmul.f32 %v531, %v910
        %v918 = vmul.f32 %v352, %v910
        %v919 = vmul.f32 %v532, %v910
        %v920 = vmul.f32 %v353, %v910
        %v921 = vmul.f32 %v533, %v910
        %v922 = vmul.f32 %v354, %v910
        %v923 = vmul.f32 %v534, %v910
        %v924 = vmul.f32 %v355, %v910
        %v925 = vmul.f32 %v535, %v910
        %v926 = vmul.f32 %v356, %v910
        %v927 = vmul.f32 %v536, %v910
        %v944 = vrot.slane %v912, 1
        %v945 = vrot.slane %v914, 1
        %v946 = vsel %vm380, %v944, %v945
        %v947 = vrot.slane %v913, 1
        %v948 = vrot.slane %v915, 1
        %v949 = vsel %vm380, %v947, %v948
        %v950 = vrot.slane %v916, 1
        %v951 = vrot.slane %v918, 1
        %v952 = vsel %vm380, %v950, %v951
        %v953 = vrot.slane %v917, 1
        %v954 = vrot.slane %v919, 1
        %v955 = vsel %vm380, %v953, %v954
        %v956 = vrot.slane %v920, 1
        %v957 = vrot.slane %v922, 1
        %v958 = vsel %vm380, %v956, %v957
        %v959 = vrot.slane %v921, 1
        %v960 = vrot.slane %v923, 1
        %v961 = vsel %vm380, %v959, %v960
        %v962 = vrot.slane %v924, 1
        %v963 = vrot.slane %v926, 1
        %v964 = vsel %vm380, %v962, %v963
        %v965 = vrot.slane %v925, 1
        %v966 = vrot.slane %v927, 1
        %v967 = vsel %vm380, %v965, %v966
        %v976 = vadd.f32 %v901, %v946
        %v977 = vadd.f32 %v902, %v949
        %v978 = vadd.f32 %v903, %v952
        %v979 = vadd.f32 %v904, %v955
        %v980 = vadd.f32 %v905, %v958
        %v981 = vadd.f32 %v906, %v961
        %v982 = vadd.f32 %v907, %v964
        %v983 = vadd.f32 %v908, %v967
        %984 = vrot.lane.b32.xlu0 %v402, 2
        %v985 = vpop.permute.xlu0 %984
        %v987 = vmul.f32 %v349, %v985
        %v988 = vmul.f32 %v529, %v985
        %v989 = vmul.f32 %v350, %v985
        %v990 = vmul.f32 %v530, %v985
        %v991 = vmul.f32 %v351, %v985
        %v992 = vmul.f32 %v531, %v985
        %v993 = vmul.f32 %v352, %v985
        %v994 = vmul.f32 %v532, %v985
        %v995 = vmul.f32 %v353, %v985
        %v996 = vmul.f32 %v533, %v985
        %v997 = vmul.f32 %v354, %v985
        %v998 = vmul.f32 %v534, %v985
        %v999 = vmul.f32 %v355, %v985
        %v1000 = vmul.f32 %v535, %v985
        %v1001 = vmul.f32 %v356, %v985
        %v1002 = vmul.f32 %v536, %v985
        %v1019 = vrot.slane %v987, 2
        %v1020 = vrot.slane %v989, 2
        %v1021 = vsel %vm420, %v1019, %v1020
        %v1022 = vrot.slane %v988, 2
        %v1023 = vrot.slane %v990, 2
        %v1024 = vsel %vm420, %v1022, %v1023
        %v1025 = vrot.slane %v991, 2
        %v1026 = vrot.slane %v993, 2
        %v1027 = vsel %vm420, %v1025, %v1026
        %v1028 = vrot.slane %v992, 2
        %v1029 = vrot.slane %v994, 2
        %v1030 = vsel %vm420, %v1028, %v1029
        %v1031 = vrot.slane %v995, 2
        %v1032 = vrot.slane %v997, 2
        %v1033 = vsel %vm420, %v1031, %v1032
        %v1034 = vrot.slane %v996, 2
        %v1035 = vrot.slane %v998, 2
        %v1036 = vsel %vm420, %v1034, %v1035
        %v1037 = vrot.slane %v999, 2
        %v1038 = vrot.slane %v1001, 2
        %v1039 = vsel %vm420, %v1037, %v1038
        %v1040 = vrot.slane %v1000, 2
        %v1041 = vrot.slane %v1002, 2
        %v1042 = vsel %vm420, %v1040, %v1041
        %v1051 = vadd.f32 %v976, %v1021
        %v1052 = vadd.f32 %v977, %v1024
        %v1053 = vadd.f32 %v978, %v1027
        %v1054 = vadd.f32 %v979, %v1030
        %v1055 = vadd.f32 %v980, %v1033
        %v1056 = vadd.f32 %v981, %v1036
        %v1057 = vadd.f32 %v982, %v1039
        %v1058 = vadd.f32 %v983, %v1042
        %1059 = vrot.lane.b32.xlu0 %v442, 2
        %v1060 = vpop.permute.xlu0 %1059
        %v1062 = vmul.f32 %v349, %v1060
        %v1063 = vmul.f32 %v529, %v1060
        %v1064 = vmul.f32 %v350, %v1060
        %v1065 = vmul.f32 %v530, %v1060
        %v1066 = vmul.f32 %v351, %v1060
        %v1067 = vmul.f32 %v531, %v1060
        %v1068 = vmul.f32 %v352, %v1060
        %v1069 = vmul.f32 %v532, %v1060
        %v1070 = vmul.f32 %v353, %v1060
        %v1071 = vmul.f32 %v533, %v1060
        %v1072 = vmul.f32 %v354, %v1060
        %v1073 = vmul.f32 %v534, %v1060
        %v1074 = vmul.f32 %v355, %v1060
        %v1075 = vmul.f32 %v535, %v1060
        %v1076 = vmul.f32 %v356, %v1060
        %v1077 = vmul.f32 %v536, %v1060
        %v1094 = vrot.slane %v1062, 3
        %v1095 = vrot.slane %v1064, 3
        %v1096 = vsel %vm460, %v1094, %v1095
        %v1097 = vrot.slane %v1063, 3
        %v1098 = vrot.slane %v1065, 3
        %v1099 = vsel %vm460, %v1097, %v1098
        %v1100 = vrot.slane %v1066, 3
        %v1101 = vrot.slane %v1068, 3
        %v1102 = vsel %vm460, %v1100, %v1101
        %v1103 = vrot.slane %v1067, 3
        %v1104 = vrot.slane %v1069, 3
        %v1105 = vsel %vm460, %v1103, %v1104
        %v1106 = vrot.slane %v1070, 3
        %v1107 = vrot.slane %v1072, 3
        %v1108 = vsel %vm460, %v1106, %v1107
        %v1109 = vrot.slane %v1071, 3
        %v1110 = vrot.slane %v1073, 3
        %v1111 = vsel %vm460, %v1109, %v1110
        %v1112 = vrot.slane %v1074, 3
        %v1113 = vrot.slane %v1076, 3
        %v1114 = vsel %vm460, %v1112, %v1113
        %v1115 = vrot.slane %v1075, 3
        %v1116 = vrot.slane %v1077, 3
        %v1117 = vsel %vm460, %v1115, %v1116
        %v1126 = vadd.f32 %v1051, %v1096
        %v1127 = vadd.f32 %v1052, %v1099
        %v1128 = vadd.f32 %v1053, %v1102
        %v1129 = vadd.f32 %v1054, %v1105
        %v1130 = vadd.f32 %v1055, %v1108
        %v1131 = vadd.f32 %v1056, %v1111
        %v1132 = vadd.f32 %v1057, %v1114
        %v1133 = vadd.f32 %v1058, %v1117
        %1134 = vrot.lane.b32.xlu0 %v482, 2
        %v1135 = vpop.permute.xlu0 %1134
        %v1137 = vmul.f32 %v349, %v1135
        %v1138 = vmul.f32 %v529, %v1135
        %v1139 = vmul.f32 %v350, %v1135
        %v1140 = vmul.f32 %v530, %v1135
        %v1141 = vmul.f32 %v351, %v1135
        %v1142 = vmul.f32 %v531, %v1135
        %v1143 = vmul.f32 %v352, %v1135
        %v1144 = vmul.f32 %v532, %v1135
        %v1145 = vmul.f32 %v353, %v1135
        %v1146 = vmul.f32 %v533, %v1135
        %v1147 = vmul.f32 %v354, %v1135
        %v1148 = vmul.f32 %v534, %v1135
        %v1149 = vmul.f32 %v355, %v1135
        %v1150 = vmul.f32 %v535, %v1135
        %v1151 = vmul.f32 %v356, %v1135
        %v1152 = vmul.f32 %v536, %v1135
        %v1169 = vrot.slane %v1137, 4
        %v1170 = vrot.slane %v1139, 4
        %v1171 = vsel %vm500, %v1169, %v1170
        %v1172 = vrot.slane %v1138, 4
        %v1173 = vrot.slane %v1140, 4
        %v1174 = vsel %vm500, %v1172, %v1173
        %v1175 = vrot.slane %v1141, 4
        %v1176 = vrot.slane %v1143, 4
        %v1177 = vsel %vm500, %v1175, %v1176
        %v1178 = vrot.slane %v1142, 4
        %v1179 = vrot.slane %v1144, 4
        %v1180 = vsel %vm500, %v1178, %v1179
        %v1181 = vrot.slane %v1145, 4
        %v1182 = vrot.slane %v1147, 4
        %v1183 = vsel %vm500, %v1181, %v1182
        %v1184 = vrot.slane %v1146, 4
        %v1185 = vrot.slane %v1148, 4
        %v1186 = vsel %vm500, %v1184, %v1185
        %v1187 = vrot.slane %v1149, 4
        %v1188 = vrot.slane %v1151, 4
        %v1189 = vsel %vm500, %v1187, %v1188
        %v1190 = vrot.slane %v1150, 4
        %v1191 = vrot.slane %v1152, 4
        %v1192 = vsel %vm500, %v1190, %v1191
        %v1201 = vadd.f32 %v1126, %v1171
        %v1202 = vadd.f32 %v1127, %v1174
        %v1203 = vadd.f32 %v1128, %v1177
        %v1204 = vadd.f32 %v1129, %v1180
        %v1205 = vadd.f32 %v1130, %v1183
        %v1206 = vadd.f32 %v1131, %v1186
        %v1207 = vadd.f32 %v1132, %v1189
        %v1208 = vadd.f32 %v1133, %v1192
        %1210 = vrot.lane.b32.xlu0 %v341, 2
        %v1211 = vpop.permute.xlu0 %1210
        %v1213 = vmul.f32 %v1201, %v1211
        %v1214 = vmul.f32 %v1202, %v1211
        %v1215 = vmul.f32 %v1203, %v1211
        %v1216 = vmul.f32 %v1204, %v1211
        %v1217 = vmul.f32 %v1205, %v1211
        %v1218 = vmul.f32 %v1206, %v1211
        %v1219 = vmul.f32 %v1207, %v1211
        %v1220 = vmul.f32 %v1208, %v1211
        %1229 = vrot.lane.b32.xlu0 %v1213, 126
        %v1230 = vpop.permute.xlu0 %1229
        %1231 = vrot.lane.b32.xlu0 %v1214, 126
        %v1232 = vpop.permute.xlu0 %1231
        %1233 = vrot.lane.b32.xlu0 %v1215, 126
        %v1234 = vpop.permute.xlu0 %1233
        %1235 = vrot.lane.b32.xlu0 %v1216, 126
        %v1236 = vpop.permute.xlu0 %1235
        %1237 = vrot.lane.b32.xlu0 %v1217, 126
        %v1238 = vpop.permute.xlu0 %1237
        %1239 = vrot.lane.b32.xlu0 %v1218, 126
        %v1240 = vpop.permute.xlu0 %1239
        %1241 = vrot.lane.b32.xlu0 %v1219, 126
        %v1242 = vpop.permute.xlu0 %1241
        %1243 = vrot.lane.b32.xlu0 %v1220, 126
        %v1244 = vpop.permute.xlu0 %1243
        %vm1245 = vcmask 1031168
        %v1246 = vsel %vm1245, %v1230, %v1232
        %v1247 = vsel %vm1245, %v1234, %v1236
        %v1248 = vsel %vm1245, %v1238, %v1240
        %v1249 = vsel %vm1245, %v1242, %v1244
        %v1254 = vadd.f32 %v894, %v1246
        %v1255 = vadd.f32 %v895, %v1247
        %v1256 = vadd.f32 %v896, %v1248
        %v1257 = vadd.f32 %v897, %v1249
        %1258 = vrot.lane.b32.xlu0 %v334, 3
        %v1259 = vpop.permute.xlu0 %1258
        %v1261 = vmul.f32 %v349, %v1259
        %v1262 = vmul.f32 %v529, %v1259
        %v1263 = vmul.f32 %v351, %v1259
        %v1264 = vmul.f32 %v531, %v1259
        %v1265 = vmul.f32 %v353, %v1259
        %v1266 = vmul.f32 %v533, %v1259
        %v1267 = vmul.f32 %v355, %v1259
        %v1268 = vmul.f32 %v535, %v1259
        %1269 = vrot.lane.b32.xlu0 %v362, 3
        %v1270 = vpop.permute.xlu0 %1269
        %v1272 = vmul.f32 %v349, %v1270
        %v1273 = vmul.f32 %v529, %v1270
        %v1274 = vmul.f32 %v350, %v1270
        %v1275 = vmul.f32 %v530, %v1270
        %v1276 = vmul.f32 %v351, %v1270
        %v1277 = vmul.f32 %v531, %v1270
        %v1278 = vmul.f32 %v352, %v1270
        %v1279 = vmul.f32 %v532, %v1270
        %v1280 = vmul.f32 %v353, %v1270
        %v1281 = vmul.f32 %v533, %v1270
        %v1282 = vmul.f32 %v354, %v1270
        %v1283 = vmul.f32 %v534, %v1270
        %v1284 = vmul.f32 %v355, %v1270
        %v1285 = vmul.f32 %v535, %v1270
        %v1286 = vmul.f32 %v356, %v1270
        %v1287 = vmul.f32 %v536, %v1270
        %v1304 = vrot.slane %v1272, 1
        %v1305 = vrot.slane %v1274, 1
        %v1306 = vsel %vm380, %v1304, %v1305
        %v1307 = vrot.slane %v1273, 1
        %v1308 = vrot.slane %v1275, 1
        %v1309 = vsel %vm380, %v1307, %v1308
        %v1310 = vrot.slane %v1276, 1
        %v1311 = vrot.slane %v1278, 1
        %v1312 = vsel %vm380, %v1310, %v1311
        %v1313 = vrot.slane %v1277, 1
        %v1314 = vrot.slane %v1279, 1
        %v1315 = vsel %vm380, %v1313, %v1314
        %v1316 = vrot.slane %v1280, 1
        %v1317 = vrot.slane %v1282, 1
        %v1318 = vsel %vm380, %v1316, %v1317
        %v1319 = vrot.slane %v1281, 1
        %v1320 = vrot.slane %v1283, 1
        %v1321 = vsel %vm380, %v1319, %v1320
        %v1322 = vrot.slane %v1284, 1
        %v1323 = vrot.slane %v1286, 1
        %v1324 = vsel %vm380, %v1322, %v1323
        %v1325 = vrot.slane %v1285, 1
        %v1326 = vrot.slane %v1287, 1
        %v1327 = vsel %vm380, %v1325, %v1326
        %v1336 = vadd.f32 %v1261, %v1306
        %v1337 = vadd.f32 %v1262, %v1309
        %v1338 = vadd.f32 %v1263, %v1312
        %v1339 = vadd.f32 %v1264, %v1315
        %v1340 = vadd.f32 %v1265, %v1318
        %v1341 = vadd.f32 %v1266, %v1321
        %v1342 = vadd.f32 %v1267, %v1324
        %v1343 = vadd.f32 %v1268, %v1327
        %1344 = vrot.lane.b32.xlu0 %v402, 3
        %v1345 = vpop.permute.xlu0 %1344
        %v1347 = vmul.f32 %v349, %v1345
        %v1348 = vmul.f32 %v529, %v1345
        %v1349 = vmul.f32 %v350, %v1345
        %v1350 = vmul.f32 %v530, %v1345
        %v1351 = vmul.f32 %v351, %v1345
        %v1352 = vmul.f32 %v531, %v1345
        %v1353 = vmul.f32 %v352, %v1345
        %v1354 = vmul.f32 %v532, %v1345
        %v1355 = vmul.f32 %v353, %v1345
        %v1356 = vmul.f32 %v533, %v1345
        %v1357 = vmul.f32 %v354, %v1345
        %v1358 = vmul.f32 %v534, %v1345
        %v1359 = vmul.f32 %v355, %v1345
        %v1360 = vmul.f32 %v535, %v1345
        %v1361 = vmul.f32 %v356, %v1345
        %v1362 = vmul.f32 %v536, %v1345
        %v1379 = vrot.slane %v1347, 2
        %v1380 = vrot.slane %v1349, 2
        %v1381 = vsel %vm420, %v1379, %v1380
        %v1382 = vrot.slane %v1348, 2
        %v1383 = vrot.slane %v1350, 2
        %v1384 = vsel %vm420, %v1382, %v1383
        %v1385 = vrot.slane %v1351, 2
        %v1386 = vrot.slane %v1353, 2
        %v1387 = vsel %vm420, %v1385, %v1386
        %v1388 = vrot.slane %v1352, 2
        %v1389 = vrot.slane %v1354, 2
        %v1390 = vsel %vm420, %v1388, %v1389
        %v1391 = vrot.slane %v1355, 2
        %v1392 = vrot.slane %v1357, 2
        %v1393 = vsel %vm420, %v1391, %v1392
        %v1394 = vrot.slane %v1356, 2
        %v1395 = vrot.slane %v1358, 2
        %v1396 = vsel %vm420, %v1394, %v1395
        %v1397 = vrot.slane %v1359, 2
        %v1398 = vrot.slane %v1361, 2
        %v1399 = vsel %vm420, %v1397, %v1398
        %v1400 = vrot.slane %v1360, 2
        %v1401 = vrot.slane %v1362, 2
        %v1402 = vsel %vm420, %v1400, %v1401
        %v1411 = vadd.f32 %v1336, %v1381
        %v1412 = vadd.f32 %v1337, %v1384
        %v1413 = vadd.f32 %v1338, %v1387
        %v1414 = vadd.f32 %v1339, %v1390
        %v1415 = vadd.f32 %v1340, %v1393
        %v1416 = vadd.f32 %v1341, %v1396
        %v1417 = vadd.f32 %v1342, %v1399
        %v1418 = vadd.f32 %v1343, %v1402
        %1419 = vrot.lane.b32.xlu0 %v442, 3
        %v1420 = vpop.permute.xlu0 %1419
        %v1422 = vmul.f32 %v349, %v1420
        %v1423 = vmul.f32 %v529, %v1420
        %v1424 = vmul.f32 %v350, %v1420
        %v1425 = vmul.f32 %v530, %v1420
        %v1426 = vmul.f32 %v351, %v1420
        %v1427 = vmul.f32 %v531, %v1420
        %v1428 = vmul.f32 %v352, %v1420
        %v1429 = vmul.f32 %v532, %v1420
        %v1430 = vmul.f32 %v353, %v1420
        %v1431 = vmul.f32 %v533, %v1420
        %v1432 = vmul.f32 %v354, %v1420
        %v1433 = vmul.f32 %v534, %v1420
        %v1434 = vmul.f32 %v355, %v1420
        %v1435 = vmul.f32 %v535, %v1420
        %v1436 = vmul.f32 %v356, %v1420
        %v1437 = vmul.f32 %v536, %v1420
        %v1454 = vrot.slane %v1422, 3
        %v1455 = vrot.slane %v1424, 3
        %v1456 = vsel %vm460, %v1454, %v1455
        %v1457 = vrot.slane %v1423, 3
        %v1458 = vrot.slane %v1425, 3
        %v1459 = vsel %vm460, %v1457, %v1458
        %v1460 = vrot.slane %v1426, 3
        %v1461 = vrot.slane %v1428, 3
        %v1462 = vsel %vm460, %v1460, %v1461
        %v1463 = vrot.slane %v1427, 3
        %v1464 = vrot.slane %v1429, 3
        %v1465 = vsel %vm460, %v1463, %v1464
        %v1466 = vrot.slane %v1430, 3
        %v1467 = vrot.slane %v1432, 3
        %v1468 = vsel %vm460, %v1466, %v1467
        %v1469 = vrot.slane %v1431, 3
        %v1470 = vrot.slane %v1433, 3
        %v1471 = vsel %vm460, %v1469, %v1470
        %v1472 = vrot.slane %v1434, 3
        %v1473 = vrot.slane %v1436, 3
        %v1474 = vsel %vm460, %v1472, %v1473
        %v1475 = vrot.slane %v1435, 3
        %v1476 = vrot.slane %v1437, 3
        %v1477 = vsel %vm460, %v1475, %v1476
        %v1486 = vadd.f32 %v1411, %v1456
        %v1487 = vadd.f32 %v1412, %v1459
        %v1488 = vadd.f32 %v1413, %v1462
        %v1489 = vadd.f32 %v1414, %v1465
        %v1490 = vadd.f32 %v1415, %v1468
        %v1491 = vadd.f32 %v1416, %v1471
        %v1492 = vadd.f32 %v1417, %v1474
        %v1493 = vadd.f32 %v1418, %v1477
        %1494 = vrot.lane.b32.xlu0 %v482, 3
        %v1495 = vpop.permute.xlu0 %1494
        %v1497 = vmul.f32 %v349, %v1495
        %v1498 = vmul.f32 %v529, %v1495
        %v1499 = vmul.f32 %v350, %v1495
        %v1500 = vmul.f32 %v530, %v1495
        %v1501 = vmul.f32 %v351, %v1495
        %v1502 = vmul.f32 %v531, %v1495
        %v1503 = vmul.f32 %v352, %v1495
        %v1504 = vmul.f32 %v532, %v1495
        %v1505 = vmul.f32 %v353, %v1495
        %v1506 = vmul.f32 %v533, %v1495
        %v1507 = vmul.f32 %v354, %v1495
        %v1508 = vmul.f32 %v534, %v1495
        %v1509 = vmul.f32 %v355, %v1495
        %v1510 = vmul.f32 %v535, %v1495
        %v1511 = vmul.f32 %v356, %v1495
        %v1512 = vmul.f32 %v536, %v1495
        %v1529 = vrot.slane %v1497, 4
        %v1530 = vrot.slane %v1499, 4
        %v1531 = vsel %vm500, %v1529, %v1530
        %v1532 = vrot.slane %v1498, 4
        %v1533 = vrot.slane %v1500, 4
        %v1534 = vsel %vm500, %v1532, %v1533
        %v1535 = vrot.slane %v1501, 4
        %v1536 = vrot.slane %v1503, 4
        %v1537 = vsel %vm500, %v1535, %v1536
        %v1538 = vrot.slane %v1502, 4
        %v1539 = vrot.slane %v1504, 4
        %v1540 = vsel %vm500, %v1538, %v1539
        %v1541 = vrot.slane %v1505, 4
        %v1542 = vrot.slane %v1507, 4
        %v1543 = vsel %vm500, %v1541, %v1542
        %v1544 = vrot.slane %v1506, 4
        %v1545 = vrot.slane %v1508, 4
        %v1546 = vsel %vm500, %v1544, %v1545
        %v1547 = vrot.slane %v1509, 4
        %v1548 = vrot.slane %v1511, 4
        %v1549 = vsel %vm500, %v1547, %v1548
        %v1550 = vrot.slane %v1510, 4
        %v1551 = vrot.slane %v1512, 4
        %v1552 = vsel %vm500, %v1550, %v1551
        %v1561 = vadd.f32 %v1486, %v1531
        %v1562 = vadd.f32 %v1487, %v1534
        %v1563 = vadd.f32 %v1488, %v1537
        %v1564 = vadd.f32 %v1489, %v1540
        %v1565 = vadd.f32 %v1490, %v1543
        %v1566 = vadd.f32 %v1491, %v1546
        %v1567 = vadd.f32 %v1492, %v1549
        %v1568 = vadd.f32 %v1493, %v1552
        %1570 = vrot.lane.b32.xlu0 %v342, 3
        %v1571 = vpop.permute.xlu0 %1570
        %v1573 = vmul.f32 %v1561, %v1571
        %v1574 = vmul.f32 %v1562, %v1571
        %v1575 = vmul.f32 %v1563, %v1571
        %v1576 = vmul.f32 %v1564, %v1571
        %v1577 = vmul.f32 %v1565, %v1571
        %v1578 = vmul.f32 %v1566, %v1571
        %v1579 = vmul.f32 %v1567, %v1571
        %v1580 = vmul.f32 %v1568, %v1571
        %1589 = vrot.lane.b32.xlu0 %v1573, 125
        %v1590 = vpop.permute.xlu0 %1589
        %1591 = vrot.lane.b32.xlu0 %v1574, 125
        %v1592 = vpop.permute.xlu0 %1591
        %1593 = vrot.lane.b32.xlu0 %v1575, 125
        %v1594 = vpop.permute.xlu0 %1593
        %1595 = vrot.lane.b32.xlu0 %v1576, 125
        %v1596 = vpop.permute.xlu0 %1595
        %1597 = vrot.lane.b32.xlu0 %v1577, 125
        %v1598 = vpop.permute.xlu0 %1597
        %1599 = vrot.lane.b32.xlu0 %v1578, 125
        %v1600 = vpop.permute.xlu0 %1599
        %1601 = vrot.lane.b32.xlu0 %v1579, 125
        %v1602 = vpop.permute.xlu0 %1601
        %1603 = vrot.lane.b32.xlu0 %v1580, 125
        %v1604 = vpop.permute.xlu0 %1603
        %vm1605 = vcmask 1022976
        %v1606 = vsel %vm1605, %v1590, %v1592
        %v1607 = vsel %vm1605, %v1594, %v1596
        %v1608 = vsel %vm1605, %v1598, %v1600
        %v1609 = vsel %vm1605, %v1602, %v1604
        %v1614 = vadd.f32 %v1254, %v1606
        %v1615 = vadd.f32 %v1255, %v1607
        %v1616 = vadd.f32 %v1256, %v1608
        %v1617 = vadd.f32 %v1257, %v1609
        %1618 = vrot.lane.b32.xlu0 %v334, 4
        %v1619 = vpop.permute.xlu0 %1618
        %v1621 = vmul.f32 %v349, %v1619
        %v1622 = vmul.f32 %v529, %v1619
        %v1623 = vmul.f32 %v351, %v1619
        %v1624 = vmul.f32 %v531, %v1619
        %v1625 = vmul.f32 %v353, %v1619
        %v1626 = vmul.f32 %v533, %v1619
        %v1627 = vmul.f32 %v355, %v1619
        %v1628 = vmul.f32 %v535, %v1619
        %1629 = vrot.lane.b32.xlu0 %v362, 4
        %v1630 = vpop.permute.xlu0 %1629
        %v1632 = vmul.f32 %v349, %v1630
        %v1633 = vmul.f32 %v529, %v1630
        %v1634 = vmul.f32 %v350, %v1630
        %v1635 = vmul.f32 %v530, %v1630
        %v1636 = vmul.f32 %v351, %v1630
        %v1637 = vmul.f32 %v531, %v1630
        %v1638 = vmul.f32 %v352, %v1630
        %v1639 = vmul.f32 %v532, %v1630
        %v1640 = vmul.f32 %v353, %v1630
        %v1641 = vmul.f32 %v533, %v1630
        %v1642 = vmul.f32 %v354, %v1630
        %v1643 = vmul.f32 %v534, %v1630
        %v1644 = vmul.f32 %v355, %v1630
        %v1645 = vmul.f32 %v535, %v1630
        %v1646 = vmul.f32 %v356, %v1630
        %v1647 = vmul.f32 %v536, %v1630
        %v1664 = vrot.slane %v1632, 1
        %v1665 = vrot.slane %v1634, 1
        %v1666 = vsel %vm380, %v1664, %v1665
        %v1667 = vrot.slane %v1633, 1
        %v1668 = vrot.slane %v1635, 1
        %v1669 = vsel %vm380, %v1667, %v1668
        %v1670 = vrot.slane %v1636, 1
        %v1671 = vrot.slane %v1638, 1
        %v1672 = vsel %vm380, %v1670, %v1671
        %v1673 = vrot.slane %v1637, 1
        %v1674 = vrot.slane %v1639, 1
        %v1675 = vsel %vm380, %v1673, %v1674
        %v1676 = vrot.slane %v1640, 1
        %v1677 = vrot.slane %v1642, 1
        %v1678 = vsel %vm380, %v1676, %v1677
        %v1679 = vrot.slane %v1641, 1
        %v1680 = vrot.slane %v1643, 1
        %v1681 = vsel %vm380, %v1679, %v1680
        %v1682 = vrot.slane %v1644, 1
        %v1683 = vrot.slane %v1646, 1
        %v1684 = vsel %vm380, %v1682, %v1683
        %v1685 = vrot.slane %v1645, 1
        %v1686 = vrot.slane %v1647, 1
        %v1687 = vsel %vm380, %v1685, %v1686
        %v1696 = vadd.f32 %v1621, %v1666
        %v1697 = vadd.f32 %v1622, %v1669
        %v1698 = vadd.f32 %v1623, %v1672
        %v1699 = vadd.f32 %v1624, %v1675
        %v1700 = vadd.f32 %v1625, %v1678
        %v1701 = vadd.f32 %v1626, %v1681
        %v1702 = vadd.f32 %v1627, %v1684
        %v1703 = vadd.f32 %v1628, %v1687
        %1704 = vrot.lane.b32.xlu0 %v402, 4
        %v1705 = vpop.permute.xlu0 %1704
        %v1707 = vmul.f32 %v349, %v1705
        %v1708 = vmul.f32 %v529, %v1705
        %v1709 = vmul.f32 %v350, %v1705
        %v1710 = vmul.f32 %v530, %v1705
        %v1711 = vmul.f32 %v351, %v1705
        %v1712 = vmul.f32 %v531, %v1705
        %v1713 = vmul.f32 %v352, %v1705
        %v1714 = vmul.f32 %v532, %v1705
        %v1715 = vmul.f32 %v353, %v1705
        %v1716 = vmul.f32 %v533, %v1705
        %v1717 = vmul.f32 %v354, %v1705
        %v1718 = vmul.f32 %v534, %v1705
        %v1719 = vmul.f32 %v355, %v1705
        %v1720 = vmul.f32 %v535, %v1705
        %v1721 = vmul.f32 %v356, %v1705
        %v1722 = vmul.f32 %v536, %v1705
        %v1739 = vrot.slane %v1707, 2
        %v1740 = vrot.slane %v1709, 2
        %v1741 = vsel %vm420, %v1739, %v1740
        %v1742 = vrot.slane %v1708, 2
        %v1743 = vrot.slane %v1710, 2
        %v1744 = vsel %vm420, %v1742, %v1743
        %v1745 = vrot.slane %v1711, 2
        %v1746 = vrot.slane %v1713, 2
        %v1747 = vsel %vm420, %v1745, %v1746
        %v1748 = vrot.slane %v1712, 2
        %v1749 = vrot.slane %v1714, 2
        %v1750 = vsel %vm420, %v1748, %v1749
        %v1751 = vrot.slane %v1715, 2
        %v1752 = vrot.slane %v1717, 2
        %v1753 = vsel %vm420, %v1751, %v1752
        %v1754 = vrot.slane %v1716, 2
        %v1755 = vrot.slane %v1718, 2
        %v1756 = vsel %vm420, %v1754, %v1755
        %v1757 = vrot.slane %v1719, 2
        %v1758 = vrot.slane %v1721, 2
        %v1759 = vsel %vm420, %v1757, %v1758
        %v1760 = vrot.slane %v1720, 2
        %v1761 = vrot.slane %v1722, 2
        %v1762 = vsel %vm420, %v1760, %v1761
        %v1771 = vadd.f32 %v1696, %v1741
        %v1772 = vadd.f32 %v1697, %v1744
        %v1773 = vadd.f32 %v1698, %v1747
        %v1774 = vadd.f32 %v1699, %v1750
        %v1775 = vadd.f32 %v1700, %v1753
        %v1776 = vadd.f32 %v1701, %v1756
        %v1777 = vadd.f32 %v1702, %v1759
        %v1778 = vadd.f32 %v1703, %v1762
        %1779 = vrot.lane.b32.xlu0 %v442, 4
        %v1780 = vpop.permute.xlu0 %1779
        %v1782 = vmul.f32 %v349, %v1780
        %v1783 = vmul.f32 %v529, %v1780
        %v1784 = vmul.f32 %v350, %v1780
        %v1785 = vmul.f32 %v530, %v1780
        %v1786 = vmul.f32 %v351, %v1780
        %v1787 = vmul.f32 %v531, %v1780
        %v1788 = vmul.f32 %v352, %v1780
        %v1789 = vmul.f32 %v532, %v1780
        %v1790 = vmul.f32 %v353, %v1780
        %v1791 = vmul.f32 %v533, %v1780
        %v1792 = vmul.f32 %v354, %v1780
        %v1793 = vmul.f32 %v534, %v1780
        %v1794 = vmul.f32 %v355, %v1780
        %v1795 = vmul.f32 %v535, %v1780
        %v1796 = vmul.f32 %v356, %v1780
        %v1797 = vmul.f32 %v536, %v1780
        %v1814 = vrot.slane %v1782, 3
        %v1815 = vrot.slane %v1784, 3
        %v1816 = vsel %vm460, %v1814, %v1815
        %v1817 = vrot.slane %v1783, 3
        %v1818 = vrot.slane %v1785, 3
        %v1819 = vsel %vm460, %v1817, %v1818
        %v1820 = vrot.slane %v1786, 3
        %v1821 = vrot.slane %v1788, 3
        %v1822 = vsel %vm460, %v1820, %v1821
        %v1823 = vrot.slane %v1787, 3
        %v1824 = vrot.slane %v1789, 3
        %v1825 = vsel %vm460, %v1823, %v1824
        %v1826 = vrot.slane %v1790, 3
        %v1827 = vrot.slane %v1792, 3
        %v1828 = vsel %vm460, %v1826, %v1827
        %v1829 = vrot.slane %v1791, 3
        %v1830 = vrot.slane %v1793, 3
        %v1831 = vsel %vm460, %v1829, %v1830
        %v1832 = vrot.slane %v1794, 3
        %v1833 = vrot.slane %v1796, 3
        %v1834 = vsel %vm460, %v1832, %v1833
        %v1835 = vrot.slane %v1795, 3
        %v1836 = vrot.slane %v1797, 3
        %v1837 = vsel %vm460, %v1835, %v1836
        %v1846 = vadd.f32 %v1771, %v1816
        %v1847 = vadd.f32 %v1772, %v1819
        %v1848 = vadd.f32 %v1773, %v1822
        %v1849 = vadd.f32 %v1774, %v1825
        %v1850 = vadd.f32 %v1775, %v1828
        %v1851 = vadd.f32 %v1776, %v1831
        %v1852 = vadd.f32 %v1777, %v1834
        %v1853 = vadd.f32 %v1778, %v1837
        %1854 = vrot.lane.b32.xlu0 %v482, 4
        %v1855 = vpop.permute.xlu0 %1854
        %v1857 = vmul.f32 %v349, %v1855
        %v1858 = vmul.f32 %v529, %v1855
        %v1859 = vmul.f32 %v350, %v1855
        %v1860 = vmul.f32 %v530, %v1855
        %v1861 = vmul.f32 %v351, %v1855
        %v1862 = vmul.f32 %v531, %v1855
        %v1863 = vmul.f32 %v352, %v1855
        %v1864 = vmul.f32 %v532, %v1855
        %v1865 = vmul.f32 %v353, %v1855
        %v1866 = vmul.f32 %v533, %v1855
        %v1867 = vmul.f32 %v354, %v1855
        %v1868 = vmul.f32 %v534, %v1855
        %v1869 = vmul.f32 %v355, %v1855
        %v1870 = vmul.f32 %v535, %v1855
        %v1871 = vmul.f32 %v356, %v1855
        %v1872 = vmul.f32 %v536, %v1855
        %v1889 = vrot.slane %v1857, 4
        %v1890 = vrot.slane %v1859, 4
        %v1891 = vsel %vm500, %v1889, %v1890
        %v1892 = vrot.slane %v1858, 4
        %v1893 = vrot.slane %v1860, 4
        %v1894 = vsel %vm500, %v1892, %v1893
        %v1895 = vrot.slane %v1861, 4
        %v1896 = vrot.slane %v1863, 4
        %v1897 = vsel %vm500, %v1895, %v1896
        %v1898 = vrot.slane %v1862, 4
        %v1899 = vrot.slane %v1864, 4
        %v1900 = vsel %vm500, %v1898, %v1899
        %v1901 = vrot.slane %v1865, 4
        %v1902 = vrot.slane %v1867, 4
        %v1903 = vsel %vm500, %v1901, %v1902
        %v1904 = vrot.slane %v1866, 4
        %v1905 = vrot.slane %v1868, 4
        %v1906 = vsel %vm500, %v1904, %v1905
        %v1907 = vrot.slane %v1869, 4
        %v1908 = vrot.slane %v1871, 4
        %v1909 = vsel %vm500, %v1907, %v1908
        %v1910 = vrot.slane %v1870, 4
        %v1911 = vrot.slane %v1872, 4
        %v1912 = vsel %vm500, %v1910, %v1911
        %v1921 = vadd.f32 %v1846, %v1891
        %v1922 = vadd.f32 %v1847, %v1894
        %v1923 = vadd.f32 %v1848, %v1897
        %v1924 = vadd.f32 %v1849, %v1900
        %v1925 = vadd.f32 %v1850, %v1903
        %v1926 = vadd.f32 %v1851, %v1906
        %v1927 = vadd.f32 %v1852, %v1909
        %v1928 = vadd.f32 %v1853, %v1912
        %1930 = vrot.lane.b32.xlu0 %v343, 4
        %v1931 = vpop.permute.xlu0 %1930
        %v1933 = vmul.f32 %v1921, %v1931
        %v1934 = vmul.f32 %v1922, %v1931
        %v1935 = vmul.f32 %v1923, %v1931
        %v1936 = vmul.f32 %v1924, %v1931
        %v1937 = vmul.f32 %v1925, %v1931
        %v1938 = vmul.f32 %v1926, %v1931
        %v1939 = vmul.f32 %v1927, %v1931
        %v1940 = vmul.f32 %v1928, %v1931
        %1949 = vrot.lane.b32.xlu0 %v1933, 124
        %v1950 = vpop.permute.xlu0 %1949
        %1951 = vrot.lane.b32.xlu0 %v1934, 124
        %v1952 = vpop.permute.xlu0 %1951
        %1953 = vrot.lane.b32.xlu0 %v1935, 124
        %v1954 = vpop.permute.xlu0 %1953
        %1955 = vrot.lane.b32.xlu0 %v1936, 124
        %v1956 = vpop.permute.xlu0 %1955
        %1957 = vrot.lane.b32.xlu0 %v1937, 124
        %v1958 = vpop.permute.xlu0 %1957
        %1959 = vrot.lane.b32.xlu0 %v1938, 124
        %v1960 = vpop.permute.xlu0 %1959
        %1961 = vrot.lane.b32.xlu0 %v1939, 124
        %v1962 = vpop.permute.xlu0 %1961
        %1963 = vrot.lane.b32.xlu0 %v1940, 124
        %v1964 = vpop.permute.xlu0 %1963
        %vm1965 = vcmask 1014784
        %v1966 = vsel %vm1965, %v1950, %v1952
        %v1967 = vsel %vm1965, %v1954, %v1956
        %v1968 = vsel %vm1965, %v1958, %v1960
        %v1969 = vsel %vm1965, %v1962, %v1964
        %v1974 = vadd.f32 %v1614, %v1966
        %v1975 = vadd.f32 %v1615, %v1967
        %v1976 = vadd.f32 %v1616, %v1968
        %v1977 = vadd.f32 %v1617, %v1969
        %1978 = vst [vmem:[%s327] sm:$0xff] %v1974
        %1979 = vst [vmem:[%s327 + $0x8] sm:$0xff] %v1975
        %1980 = vst [vmem:[%s327 + $0x10] sm:$0xff] %v1976
        %1981 = vst [vmem:[%s327 + $0x18] sm:$0xff] %v1977
        %s1982 = sand.u32 %s121, 1
        %s1983 = scalar_lea.sflag [#allocation5], %s1982
        %s1984 = sand.u32 %s121, 1
        %s1985 = smul.addr %s1984, 32
        %s1986 = scalar_lea.vmem [#allocation4], %s1985
        // Predicated region
        $region109: #{tpu_custom_call.1} parent=99 // pred_check
          %p1987 = pneg %p131
        $region110: #{tpu_custom_call.1} parent=99 // pred_check_branch
          %1989 = sbr.rel (%p1987) target = $region112
        $region111: #{tpu_custom_call.1} parent=99 // pred_region
          %1991 = vsyncadd %s1983, 0
          %s1992 = smul.addr %s21, 8
          %s1993 = sadd.s32 %s22, %s1992
          %s1994 = smul.addr %s1993, 8
          %s1995 = scalar_lea.hbm %s3, %s1994
          %s1996 = sshll.u32 %s1986, 4
          %s1997 = int_to_ptr.vmem [resolvable:$true] %s1996
          %s1998 = sshll.u32 %s1995, 4
          %s1999 = int_to_ptr.hbm [resolvable:$true] %s1998
          %2004 = dma.vmem_to_hbm [thread:$0]  %s1997, 512, %s1999, %s1983, 128, 256, 8
        $region112: #{tpu_custom_call.1} parent=99 // pred_fallthru
          _
      $region100: #{tpu_custom_call.1} parent=5 // pred_fallthru
        _
      %p2005 = scmp.le.s32.totalorder 2, %s12
      // Predicated region
      $region113: #{tpu_custom_call.1} parent=5 // pred_check
        %p2006 = pneg %p2005
      $region114: #{tpu_custom_call.1} parent=5 // pred_check_branch
        %2008 = sbr.rel (%p2006) target = $region116
      $region115: #{tpu_custom_call.1} parent=5 // pred_region
        %s2009 = ssub.s32 %s12, 2
        // Predicated region
        $region117: #{tpu_custom_call.1} parent=115 // pred_check
          %p2010 = pneg %p137
        $region118: #{tpu_custom_call.1} parent=115 // pred_check_branch
          %2012 = sbr.rel (%p2010) target = $region120
        $region119: #{tpu_custom_call.1} parent=115 // pred_region
          %s2013 = sand.u32 %s122, 1
          %s2014 = scalar_lea.sflag [#allocation5], %s2013
          %s2015 = sand.u32 %s122, 1
          %s2016 = smul.addr %s2015, 32
          %s2017 = scalar_lea.vmem [#allocation4], %s2016
          %2019 = dma.done %s2014, 512
        $region120: #{tpu_custom_call.1} parent=115 // pred_fallthru
          _
      $region116: #{tpu_custom_call.1} parent=5 // pred_fallthru
        _
    $region6: #{tpu_custom_call.1} parent=1 // loop_footer
      %s16 = sadd.s32 1, %s12
    $region7: #{tpu_custom_call.1} parent=1 // loop_footer_branch
      %11 = sbr.rel target = $region3
    $region8: #{tpu_custom_call.1} parent=1 // loop_exit
      _
    %2020 = vsyncpa [#allocation5], 1
    %s2021 = scalar_lea.sflag [#allocation5], 1
    %2022 = vsyncpa %s2021, 1

</llo_original>
